<compile_context>
chip_gen: v7x
topology: tpu7x:2x2x1
jax: 0.10.0
libtpu: 0.0.40
codegen_flags: <defaults>
</compile_context>

<pallas_src>
import functools
from math import exp

import numpy as np
import jax
import jax.numpy as jnp
from jax import lax
from jax.experimental import pallas as pl
from jax.experimental.pallas import tpu as pltpu


def gaussian_1d(window_size: int, sigma: float = 1.5) -> np.ndarray:
    """1-D Gaussian, identical to gaussian() in the PyTorch reference (window = outer(g, g))."""
    g = np.array(
        [exp(-((x - window_size // 2) ** 2) / float(2 * sigma ** 2)) for x in range(window_size)],
        dtype=np.float64,
    )
    g = g / g.sum()
    return g.astype(np.float32)


def _round_up(x: int, m: int) -> int:
    return ((x + m - 1) // m) * m


def _ssim_kernel(c_ref, a_ref, b_ref, out_ref, *, g, k, th_out, w_acc, out_h, out_w):
    # c_ref : SMEM (2,)  = [C1, C2]
    # a_ref/b_ref : VMEM (1, 1, th_in, w_pad) halo'd slab of img1 / img2 for this (n*c, h_tile)
    # out_ref : VMEM (1, 1, 1) per-(n,c) partial sum, accumulated across the h-tile grid axis
    t = pl.program_id(1)
    c1 = c_ref[0]
    c2 = c_ref[1]

    x1 = a_ref[0, 0, :, :]
    x2 = b_ref[0, 0, :, :]

    def row_blur(v):
        # (th_in, w_pad) -> (th_in, w_acc); lane-direction 1-D Gaussian (VALID)
        acc = g[0] * v[:, 0:w_acc]
        for u in range(1, k):
            acc = acc + g[u] * v[:, u:u + w_acc]
        return acc

    def col_blur(v):
        # (th_in, w_acc) -> (th_out, w_acc); sublane-direction 1-D Gaussian (VALID)
        acc = g[0] * v[0:th_out, :]
        for u in range(1, k):
            acc = acc + g[u] * v[u:u + th_out, :]
        return acc

    def blur(v):
        return col_blur(row_blur(v))

    mu1 = blur(x1)
    mu2 = blur(x2)
    e11 = blur(x1 * x1)
    e22 = blur(x2 * x2)
    e12 = blur(x1 * x2)

    mu1_sq = mu1 * mu1
    mu2_sq = mu2 * mu2
    mu1_mu2 = mu1 * mu2
    sigma1_sq = e11 - mu1_sq
    sigma2_sq = e22 - mu2_sq
    sigma12 = e12 - mu1_mu2

    v1 = 2.0 * sigma12 + c2
    v2 = sigma1_sq + sigma2_sq + c2
    num = (2.0 * mu1_mu2 + c1) * v1
    den = (mu1_sq + mu2_sq + c1) * v2

    # EUP reciprocal + one Newton step (restores ~f32 accuracy, well inside 1e-3 tolerance).
    r = pl.reciprocal(den, approx=True)
    r = r * (2.0 - den * r)
    ssim_map = num * r

    # Valid-region mask: global output row < out_h, column < out_w (rest is zero-padding garbage).
    rows_left = out_h - t * th_out
    row_ids = lax.broadcasted_iota(jnp.int32, (th_out, w_acc), 0)
    col_ids = lax.broadcasted_iota(jnp.int32, (th_out, w_acc), 1)
    mask = (row_ids < rows_left) & (col_ids < out_w)
    part = jnp.sum(jnp.where(mask, ssim_map, 0.0))

    @pl.when(t == 0)
    def _():
        out_ref[...] = jnp.zeros_like(out_ref)

    out_ref[...] = out_ref[...] + part.reshape(1, 1, 1)


def ssim_pallas(img1, img2, window_size=11, size_average=True, val_range=None):
    n, c, h, w = img1.shape
    k = int(min(window_size, h, w))
    g = gaussian_1d(k)
    out_h = h - k + 1
    out_w = w - k + 1

    # Dynamic-range logic of the reference (data dependent -> JAX glue).
    if val_range is None:
        max_val = jnp.where(jnp.max(img1) > 128, 255.0, 1.0)
        min_val = jnp.where(jnp.min(img1) < -0.5, -1.0, 0.0)
        dyn_l = max_val - min_val
    else:
        dyn_l = jnp.float32(val_range)
    c1 = (0.01 * dyn_l) ** 2
    c2 = (0.03 * dyn_l) ** 2
    c_vals = jnp.stack([c1, c2]).astype(jnp.float32)

    # ---- Tiling ----------------------------------------------------------
    w_acc = _round_up(out_w, 128)                 # lane-dense accumulator width
    w_pad = w_acc + k - 1                         # input width needed for all lane shifts
    rows_budget = max(8, (1 << 20) // (4 * w_acc))   # ~1 MiB per working array
    th_out = max(8, min(_round_up(out_h, 8), _round_up(min(rows_budget, 128), 8)))
    n_t = -(-out_h // th_out)                     # ceil-div: number of H tiles
    th_in = _round_up(th_out + k - 1, 8)          # slab rows (output tile + halo), sublane aligned
    h_pad = (n_t - 1) * th_out + th_in            # padded image height covering all slabs

    def to_slabs(x):
        x = x.astype(jnp.float32)
        x = jnp.pad(x, ((0, 0), (0, 0), (0, h_pad - h), (0, w_pad - w)))
        x = x.reshape(n * c, h_pad, w_pad)
        slabs = jnp.stack(
            [lax.slice_in_dim(x, t * th_out, t * th_out + th_in, axis=1) for t in range(n_t)],
            axis=1,
        )
        return slabs  # (n*c, n_t, th_in, w_pad)

    s1 = to_slabs(img1)
    s2 = to_slabs(img2)

    kernel = functools.partial(
        _ssim_kernel,
        g=tuple(float(v) for v in g),
        k=k, th_out=th_out, w_acc=w_acc, out_h=out_h, out_w=out_w,
    )

    partial_sums = pl.pallas_call(
        kernel,
        out_shape=jax.ShapeDtypeStruct((n * c, 1, 1), jnp.float32),
        grid=(n * c, n_t),
        in_specs=[
            pl.BlockSpec(memory_space=pltpu.SMEM),                            # [C1, C2]
            pl.BlockSpec((1, 1, th_in, w_pad), lambda p, t: (p, t, 0, 0)),    # img1 slab
            pl.BlockSpec((1, 1, th_in, w_pad), lambda p, t: (p, t, 0, 0)),    # img2 slab
        ],
        out_specs=pl.BlockSpec((1, 1, 1), lambda p, t: (p, 0, 0)),
        compiler_params=pltpu.CompilerParams(
            dimension_semantics=("parallel", "arbitrary"),
            vmem_limit_bytes=48 * 1024 * 1024,
        ),
    )(c_vals, s1, s2)

    sums = partial_sums.reshape(n, c)
    denom = float(out_h * out_w)
    if size_average:
        return jnp.sum(sums) / (n * c * denom)
    return jnp.sum(sums, axis=1) / (c * denom)


class SSIMPallas:
    """Mirrors the PyTorch SSIM module's forward (size_average=True, val_range=None)."""

    def __init__(self, window_size=11, size_average=True, val_range=None):
        self.window_size = window_size
        self.size_average = size_average
        self.val_range = val_range

    def __call__(self, img1, img2):
        return ssim_pallas(img1, img2, window_size=self.window_size,
                           size_average=self.size_average, val_range=self.val_range)


def _ssim_ref_jax(img1, img2, window_size=11):
    """Pure-JAX reference (lax grouped conv, HIGHEST precision) for correctness checking."""
    n, c, h, w = img1.shape
    k = int(min(window_size, h, w))
    g = jnp.asarray(gaussian_1d(k))
    w2d = jnp.outer(g, g)
    win = jnp.broadcast_to(w2d[None, None], (c, 1, k, k))

    def conv(x):
        return lax.conv_general_dilated(
            x, win, window_strides=(1, 1), padding="VALID",
            feature_group_count=c, dimension_numbers=("NCHW", "OIHW", "NCHW"),
            precision=lax.Precision.HIGHEST)

    max_val = jnp.where(jnp.max(img1) > 128, 255.0, 1.0)
    min_val = jnp.where(jnp.min(img1) < -0.5, -1.0, 0.0)
    dyn_l = max_val - min_val
    c1 = (0.01 * dyn_l) ** 2
    c2 = (0.03 * dyn_l) ** 2

    mu1, mu2 = conv(img1), conv(img2)
    mu1_sq, mu2_sq, mu1_mu2 = mu1 ** 2, mu2 ** 2, mu1 * mu2
    sigma1_sq = conv(img1 * img1) - mu1_sq
    sigma2_sq = conv(img2 * img2) - mu2_sq
    sigma12 = conv(img1 * img2) - mu1_mu2
    v1 = 2.0 * sigma12 + c2
    v2 = sigma1_sq + sigma2_sq + c2
    ssim_map = (2.0 * mu1_mu2 + c1) * v1 / ((mu1_sq + mu2_sq + c1) * v2)
    return jnp.mean(ssim_map)


if __name__ == "__main__":
    key = jax.random.PRNGKey(0)
    k1, k2 = jax.random.split(key)
    img1 = jax.random.uniform(k1, (2, 3, 16, 16), dtype=jnp.float32)
    img2 = jax.random.uniform(k2, (2, 3, 16, 16), dtype=jnp.float32)

    model = SSIMPallas(window_size=11, size_average=True)
    out = model(img1, img2)
    out = jax.block_until_ready(out)

    ref = jax.block_until_ready(_ssim_ref_jax(img1, img2, window_size=11))
    assert out.shape == () and out.dtype == jnp.float32
    assert jnp.allclose(out, ref, rtol=1e-3, atol=1e-3), (out, ref)

    # Also exercise the size_average=False branch once.
    out_b = jax.block_until_ready(
        SSIMPallas(window_size=11, size_average=False)(img1, img2))
    assert out_b.shape == (2,)

    print("KERNEL_OK")
</pallas_src>

<mosaic_0001>
module attributes {stable_mosaic.version = 11 : i64} {
  func.func @_ssim_kernel(%arg0: i32, %arg1: i32, %arg2: memref<2xf32, #tpu.memory_space<smem>>, %arg3: memref<1x1x24x138xf32, #tpu.memory_space<vmem>>, %arg4: memref<1x1x24x138xf32, #tpu.memory_space<vmem>>, %arg5: memref<1x1x1xf32, #tpu.memory_space<vmem>>) attributes {dimension_semantics = [#tpu.dimension_semantics<parallel>, #tpu.dimension_semantics<arbitrary>], iteration_bounds = array<i64: 6, 1>, scalar_prefetch = 0 : i64, scratch_operands = 0 : i64, tpu.core_type = #tpu.core_type<tc>, window_params = [{transform_indices = @transform_0, window_bounds = array<i64: 2>}, {transform_indices = @transform_1, window_bounds = array<i64: 1, 1, 24, 138>}, {transform_indices = @transform_2, window_bounds = array<i64: 1, 1, 24, 138>}, {transform_indices = @transform_3, window_bounds = array<i64: 1, 1, 1>}]} {
    %c0 = arith.constant 0 : index
    %0 = memref.load %arg2[%c0] : memref<2xf32, #tpu.memory_space<smem>>
    %c1 = arith.constant 1 : index
    %1 = memref.load %arg2[%c1] : memref<2xf32, #tpu.memory_space<smem>>
    %c0_0 = arith.constant 0 : index
    %c0_1 = arith.constant 0 : index
    %c0_2 = arith.constant 0 : index
    %c0_3 = arith.constant 0 : index
    %2 = vector.load %arg3[%c0_0, %c0_1, %c0_2, %c0_3] : memref<1x1x24x138xf32, #tpu.memory_space<vmem>>, vector<1x1x24x138xf32>
    %3 = vector.shape_cast %2 : vector<1x1x24x138xf32> to vector<24x138xf32>
    %c0_4 = arith.constant 0 : index
    %c0_5 = arith.constant 0 : index
    %c0_6 = arith.constant 0 : index
    %c0_7 = arith.constant 0 : index
    %4 = vector.load %arg4[%c0_4, %c0_5, %c0_6, %c0_7] : memref<1x1x24x138xf32, #tpu.memory_space<vmem>>, vector<1x1x24x138xf32>
    %5 = vector.shape_cast %4 : vector<1x1x24x138xf32> to vector<24x138xf32>
    %6 = vector.extract_strided_slice %3 {offsets = [0, 0], sizes = [24, 128], strides = [1, 1]} : vector<24x138xf32> to vector<24x128xf32>
    %cst = arith.constant 0.00102838012 : f32
    %7 = vector.broadcast %cst : f32 to vector<24x128xf32>
    %8 = arith.mulf %7, %6 : vector<24x128xf32>
    %9 = vector.extract_strided_slice %3 {offsets = [0, 1], sizes = [24, 128], strides = [1, 1]} : vector<24x138xf32> to vector<24x128xf32>
    %cst_8 = arith.constant 0.00759875821 : f32
    %10 = vector.broadcast %cst_8 : f32 to vector<24x128xf32>
    %11 = arith.mulf %10, %9 : vector<24x128xf32>
    %12 = arith.addf %8, %11 : vector<24x128xf32>
    %13 = vector.extract_strided_slice %3 {offsets = [0, 2], sizes = [24, 128], strides = [1, 1]} : vector<24x138xf32> to vector<24x128xf32>
    %cst_9 = arith.constant 0.0360007733 : f32
    %14 = vector.broadcast %cst_9 : f32 to vector<24x128xf32>
    %15 = arith.mulf %14, %13 : vector<24x128xf32>
    %16 = arith.addf %12, %15 : vector<24x128xf32>
    %17 = vector.extract_strided_slice %3 {offsets = [0, 3], sizes = [24, 128], strides = [1, 1]} : vector<24x138xf32> to vector<24x128xf32>
    %cst_10 = arith.constant 0.109360687 : f32
    %18 = vector.broadcast %cst_10 : f32 to vector<24x128xf32>
    %19 = arith.mulf %18, %17 : vector<24x128xf32>
    %20 = arith.addf %16, %19 : vector<24x128xf32>
    %21 = vector.extract_strided_slice %3 {offsets = [0, 4], sizes = [24, 128], strides = [1, 1]} : vector<24x138xf32> to vector<24x128xf32>
    %cst_11 = arith.constant 0.213005543 : f32
    %22 = vector.broadcast %cst_11 : f32 to vector<24x128xf32>
    %23 = arith.mulf %22, %21 : vector<24x128xf32>
    %24 = arith.addf %20, %23 : vector<24x128xf32>
    %25 = vector.extract_strided_slice %3 {offsets = [0, 5], sizes = [24, 128], strides = [1, 1]} : vector<24x138xf32> to vector<24x128xf32>
    %cst_12 = arith.constant 0.266011715 : f32
    %26 = vector.broadcast %cst_12 : f32 to vector<24x128xf32>
    %27 = arith.mulf %26, %25 : vector<24x128xf32>
    %28 = arith.addf %24, %27 : vector<24x128xf32>
    %29 = vector.extract_strided_slice %3 {offsets = [0, 6], sizes = [24, 128], strides = [1, 1]} : vector<24x138xf32> to vector<24x128xf32>
    %cst_13 = arith.constant 0.213005543 : f32
    %30 = vector.broadcast %cst_13 : f32 to vector<24x128xf32>
    %31 = arith.mulf %30, %29 : vector<24x128xf32>
    %32 = arith.addf %28, %31 : vector<24x128xf32>
    %33 = vector.extract_strided_slice %3 {offsets = [0, 7], sizes = [24, 128], strides = [1, 1]} : vector<24x138xf32> to vector<24x128xf32>
    %cst_14 = arith.constant 0.109360687 : f32
    %34 = vector.broadcast %cst_14 : f32 to vector<24x128xf32>
    %35 = arith.mulf %34, %33 : vector<24x128xf32>
    %36 = arith.addf %32, %35 : vector<24x128xf32>
    %37 = vector.extract_strided_slice %3 {offsets = [0, 8], sizes = [24, 128], strides = [1, 1]} : vector<24x138xf32> to vector<24x128xf32>
    %cst_15 = arith.constant 0.0360007733 : f32
    %38 = vector.broadcast %cst_15 : f32 to vector<24x128xf32>
    %39 = arith.mulf %38, %37 : vector<24x128xf32>
    %40 = arith.addf %36, %39 : vector<24x128xf32>
    %41 = vector.extract_strided_slice %3 {offsets = [0, 9], sizes = [24, 128], strides = [1, 1]} : vector<24x138xf32> to vector<24x128xf32>
    %cst_16 = arith.constant 0.00759875821 : f32
    %42 = vector.broadcast %cst_16 : f32 to vector<24x128xf32>
    %43 = arith.mulf %42, %41 : vector<24x128xf32>
    %44 = arith.addf %40, %43 : vector<24x128xf32>
    %45 = vector.extract_strided_slice %3 {offsets = [0, 10], sizes = [24, 128], strides = [1, 1]} : vector<24x138xf32> to vector<24x128xf32>
    %cst_17 = arith.constant 0.00102838012 : f32
    %46 = vector.broadcast %cst_17 : f32 to vector<24x128xf32>
    %47 = arith.mulf %46, %45 : vector<24x128xf32>
    %48 = arith.addf %44, %47 : vector<24x128xf32>
    %49 = vector.extract_strided_slice %48 {offsets = [0, 0], sizes = [8, 128], strides = [1, 1]} : vector<24x128xf32> to vector<8x128xf32>
    %cst_18 = arith.constant 0.00102838012 : f32
    %50 = vector.broadcast %cst_18 : f32 to vector<8x128xf32>
    %51 = arith.mulf %50, %49 : vector<8x128xf32>
    %52 = vector.extract_strided_slice %48 {offsets = [1, 0], sizes = [8, 128], strides = [1, 1]} : vector<24x128xf32> to vector<8x128xf32>
    %cst_19 = arith.constant 0.00759875821 : f32
    %53 = vector.broadcast %cst_19 : f32 to vector<8x128xf32>
    %54 = arith.mulf %53, %52 : vector<8x128xf32>
    %55 = arith.addf %51, %54 : vector<8x128xf32>
    %56 = vector.extract_strided_slice %48 {offsets = [2, 0], sizes = [8, 128], strides = [1, 1]} : vector<24x128xf32> to vector<8x128xf32>
    %cst_20 = arith.constant 0.0360007733 : f32
    %57 = vector.broadcast %cst_20 : f32 to vector<8x128xf32>
    %58 = arith.mulf %57, %56 : vector<8x128xf32>
    %59 = arith.addf %55, %58 : vector<8x128xf32>
    %60 = vector.extract_strided_slice %48 {offsets = [3, 0], sizes = [8, 128], strides = [1, 1]} : vector<24x128xf32> to vector<8x128xf32>
    %cst_21 = arith.constant 0.109360687 : f32
    %61 = vector.broadcast %cst_21 : f32 to vector<8x128xf32>
    %62 = arith.mulf %61, %60 : vector<8x128xf32>
    %63 = arith.addf %59, %62 : vector<8x128xf32>
    %64 = vector.extract_strided_slice %48 {offsets = [4, 0], sizes = [8, 128], strides = [1, 1]} : vector<24x128xf32> to vector<8x128xf32>
    %cst_22 = arith.constant 0.213005543 : f32
    %65 = vector.broadcast %cst_22 : f32 to vector<8x128xf32>
    %66 = arith.mulf %65, %64 : vector<8x128xf32>
    %67 = arith.addf %63, %66 : vector<8x128xf32>
    %68 = vector.extract_strided_slice %48 {offsets = [5, 0], sizes = [8, 128], strides = [1, 1]} : vector<24x128xf32> to vector<8x128xf32>
    %cst_23 = arith.constant 0.266011715 : f32
    %69 = vector.broadcast %cst_23 : f32 to vector<8x128xf32>
    %70 = arith.mulf %69, %68 : vector<8x128xf32>
    %71 = arith.addf %67, %70 : vector<8x128xf32>
    %72 = vector.extract_strided_slice %48 {offsets = [6, 0], sizes = [8, 128], strides = [1, 1]} : vector<24x128xf32> to vector<8x128xf32>
    %cst_24 = arith.constant 0.213005543 : f32
    %73 = vector.broadcast %cst_24 : f32 to vector<8x128xf32>
    %74 = arith.mulf %73, %72 : vector<8x128xf32>
    %75 = arith.addf %71, %74 : vector<8x128xf32>
    %76 = vector.extract_strided_slice %48 {offsets = [7, 0], sizes = [8, 128], strides = [1, 1]} : vector<24x128xf32> to vector<8x128xf32>
    %cst_25 = arith.constant 0.109360687 : f32
    %77 = vector.broadcast %cst_25 : f32 to vector<8x128xf32>
    %78 = arith.mulf %77, %76 : vector<8x128xf32>
    %79 = arith.addf %75, %78 : vector<8x128xf32>
    %80 = vector.extract_strided_slice %48 {offsets = [8, 0], sizes = [8, 128], strides = [1, 1]} : vector<24x128xf32> to vector<8x128xf32>
    %cst_26 = arith.constant 0.0360007733 : f32
    %81 = vector.broadcast %cst_26 : f32 to vector<8x128xf32>
    %82 = arith.mulf %81, %80 : vector<8x128xf32>
    %83 = arith.addf %79, %82 : vector<8x128xf32>
    %84 = vector.extract_strided_slice %48 {offsets = [9, 0], sizes = [8, 128], strides = [1, 1]} : vector<24x128xf32> to vector<8x128xf32>
    %cst_27 = arith.constant 0.00759875821 : f32
    %85 = vector.broadcast %cst_27 : f32 to vector<8x128xf32>
    %86 = arith.mulf %85, %84 : vector<8x128xf32>
    %87 = arith.addf %83, %86 : vector<8x128xf32>
    %88 = vector.extract_strided_slice %48 {offsets = [10, 0], sizes = [8, 128], strides = [1, 1]} : vector<24x128xf32> to vector<8x128xf32>
    %cst_28 = arith.constant 0.00102838012 : f32
    %89 = vector.broadcast %cst_28 : f32 to vector<8x128xf32>
    %90 = arith.mulf %89, %88 : vector<8x128xf32>
    %91 = arith.addf %87, %90 : vector<8x128xf32>
    %92 = vector.extract_strided_slice %5 {offsets = [0, 0], sizes = [24, 128], strides = [1, 1]} : vector<24x138xf32> to vector<24x128xf32>
    %cst_29 = arith.constant 0.00102838012 : f32
    %93 = vector.broadcast %cst_29 : f32 to vector<24x128xf32>
    %94 = arith.mulf %93, %92 : vector<24x128xf32>
    %95 = vector.extract_strided_slice %5 {offsets = [0, 1], sizes = [24, 128], strides = [1, 1]} : vector<24x138xf32> to vector<24x128xf32>
    %cst_30 = arith.constant 0.00759875821 : f32
    %96 = vector.broadcast %cst_30 : f32 to vector<24x128xf32>
    %97 = arith.mulf %96, %95 : vector<24x128xf32>
    %98 = arith.addf %94, %97 : vector<24x128xf32>
    %99 = vector.extract_strided_slice %5 {offsets = [0, 2], sizes = [24, 128], strides = [1, 1]} : vector<24x138xf32> to vector<24x128xf32>
    %cst_31 = arith.constant 0.0360007733 : f32
    %100 = vector.broadcast %cst_31 : f32 to vector<24x128xf32>
    %101 = arith.mulf %100, %99 : vector<24x128xf32>
    %102 = arith.addf %98, %101 : vector<24x128xf32>
    %103 = vector.extract_strided_slice %5 {offsets = [0, 3], sizes = [24, 128], strides = [1, 1]} : vector<24x138xf32> to vector<24x128xf32>
    %cst_32 = arith.constant 0.109360687 : f32
    %104 = vector.broadcast %cst_32 : f32 to vector<24x128xf32>
    %105 = arith.mulf %104, %103 : vector<24x128xf32>
    %106 = arith.addf %102, %105 : vector<24x128xf32>
    %107 = vector.extract_strided_slice %5 {offsets = [0, 4], sizes = [24, 128], strides = [1, 1]} : vector<24x138xf32> to vector<24x128xf32>
    %cst_33 = arith.constant 0.213005543 : f32
    %108 = vector.broadcast %cst_33 : f32 to vector<24x128xf32>
    %109 = arith.mulf %108, %107 : vector<24x128xf32>
    %110 = arith.addf %106, %109 : vector<24x128xf32>
    %111 = vector.extract_strided_slice %5 {offsets = [0, 5], sizes = [24, 128], strides = [1, 1]} : vector<24x138xf32> to vector<24x128xf32>
    %cst_34 = arith.constant 0.266011715 : f32
    %112 = vector.broadcast %cst_34 : f32 to vector<24x128xf32>
    %113 = arith.mulf %112, %111 : vector<24x128xf32>
    %114 = arith.addf %110, %113 : vector<24x128xf32>
    %115 = vector.extract_strided_slice %5 {offsets = [0, 6], sizes = [24, 128], strides = [1, 1]} : vector<24x138xf32> to vector<24x128xf32>
    %cst_35 = arith.constant 0.213005543 : f32
    %116 = vector.broadcast %cst_35 : f32 to vector<24x128xf32>
    %117 = arith.mulf %116, %115 : vector<24x128xf32>
    %118 = arith.addf %114, %117 : vector<24x128xf32>
    %119 = vector.extract_strided_slice %5 {offsets = [0, 7], sizes = [24, 128], strides = [1, 1]} : vector<24x138xf32> to vector<24x128xf32>
    %cst_36 = arith.constant 0.109360687 : f32
    %120 = vector.broadcast %cst_36 : f32 to vector<24x128xf32>
    %121 = arith.mulf %120, %119 : vector<24x128xf32>
    %122 = arith.addf %118, %121 : vector<24x128xf32>
    %123 = vector.extract_strided_slice %5 {offsets = [0, 8], sizes = [24, 128], strides = [1, 1]} : vector<24x138xf32> to vector<24x128xf32>
    %cst_37 = arith.constant 0.0360007733 : f32
    %124 = vector.broadcast %cst_37 : f32 to vector<24x128xf32>
    %125 = arith.mulf %124, %123 : vector<24x128xf32>
    %126 = arith.addf %122, %125 : vector<24x128xf32>
    %127 = vector.extract_strided_slice %5 {offsets = [0, 9], sizes = [24, 128], strides = [1, 1]} : vector<24x138xf32> to vector<24x128xf32>
    %cst_38 = arith.constant 0.00759875821 : f32
    %128 = vector.broadcast %cst_38 : f32 to vector<24x128xf32>
    %129 = arith.mulf %128, %127 : vector<24x128xf32>
    %130 = arith.addf %126, %129 : vector<24x128xf32>
    %131 = vector.extract_strided_slice %5 {offsets = [0, 10], sizes = [24, 128], strides = [1, 1]} : vector<24x138xf32> to vector<24x128xf32>
    %cst_39 = arith.constant 0.00102838012 : f32
    %132 = vector.broadcast %cst_39 : f32 to vector<24x128xf32>
    %133 = arith.mulf %132, %131 : vector<24x128xf32>
    %134 = arith.addf %130, %133 : vector<24x128xf32>
    %135 = vector.extract_strided_slice %134 {offsets = [0, 0], sizes = [8, 128], strides = [1, 1]} : vector<24x128xf32> to vector<8x128xf32>
    %cst_40 = arith.constant 0.00102838012 : f32
    %136 = vector.broadcast %cst_40 : f32 to vector<8x128xf32>
    %137 = arith.mulf %136, %135 : vector<8x128xf32>
    %138 = vector.extract_strided_slice %134 {offsets = [1, 0], sizes = [8, 128], strides = [1, 1]} : vector<24x128xf32> to vector<8x128xf32>
    %cst_41 = arith.constant 0.00759875821 : f32
    %139 = vector.broadcast %cst_41 : f32 to vector<8x128xf32>
    %140 = arith.mulf %139, %138 : vector<8x128xf32>
    %141 = arith.addf %137, %140 : vector<8x128xf32>
    %142 = vector.extract_strided_slice %134 {offsets = [2, 0], sizes = [8, 128], strides = [1, 1]} : vector<24x128xf32> to vector<8x128xf32>
    %cst_42 = arith.constant 0.0360007733 : f32
    %143 = vector.broadcast %cst_42 : f32 to vector<8x128xf32>
    %144 = arith.mulf %143, %142 : vector<8x128xf32>
    %145 = arith.addf %141, %144 : vector<8x128xf32>
    %146 = vector.extract_strided_slice %134 {offsets = [3, 0], sizes = [8, 128], strides = [1, 1]} : vector<24x128xf32> to vector<8x128xf32>
    %cst_43 = arith.constant 0.109360687 : f32
    %147 = vector.broadcast %cst_43 : f32 to vector<8x128xf32>
    %148 = arith.mulf %147, %146 : vector<8x128xf32>
    %149 = arith.addf %145, %148 : vector<8x128xf32>
    %150 = vector.extract_strided_slice %134 {offsets = [4, 0], sizes = [8, 128], strides = [1, 1]} : vector<24x128xf32> to vector<8x128xf32>
    %cst_44 = arith.constant 0.213005543 : f32
    %151 = vector.broadcast %cst_44 : f32 to vector<8x128xf32>
    %152 = arith.mulf %151, %150 : vector<8x128xf32>
    %153 = arith.addf %149, %152 : vector<8x128xf32>
    %154 = vector.extract_strided_slice %134 {offsets = [5, 0], sizes = [8, 128], strides = [1, 1]} : vector<24x128xf32> to vector<8x128xf32>
    %cst_45 = arith.constant 0.266011715 : f32
    %155 = vector.broadcast %cst_45 : f32 to vector<8x128xf32>
    %156 = arith.mulf %155, %154 : vector<8x128xf32>
    %157 = arith.addf %153, %156 : vector<8x128xf32>
    %158 = vector.extract_strided_slice %134 {offsets = [6, 0], sizes = [8, 128], strides = [1, 1]} : vector<24x128xf32> to vector<8x128xf32>
    %cst_46 = arith.constant 0.213005543 : f32
    %159 = vector.broadcast %cst_46 : f32 to vector<8x128xf32>
    %160 = arith.mulf %159, %158 : vector<8x128xf32>
    %161 = arith.addf %157, %160 : vector<8x128xf32>
    %162 = vector.extract_strided_slice %134 {offsets = [7, 0], sizes = [8, 128], strides = [1, 1]} : vector<24x128xf32> to vector<8x128xf32>
    %cst_47 = arith.constant 0.109360687 : f32
    %163 = vector.broadcast %cst_47 : f32 to vector<8x128xf32>
    %164 = arith.mulf %163, %162 : vector<8x128xf32>
    %165 = arith.addf %161, %164 : vector<8x128xf32>
    %166 = vector.extract_strided_slice %134 {offsets = [8, 0], sizes = [8, 128], strides = [1, 1]} : vector<24x128xf32> to vector<8x128xf32>
    %cst_48 = arith.constant 0.0360007733 : f32
    %167 = vector.broadcast %cst_48 : f32 to vector<8x128xf32>
    %168 = arith.mulf %167, %166 : vector<8x128xf32>
    %169 = arith.addf %165, %168 : vector<8x128xf32>
    %170 = vector.extract_strided_slice %134 {offsets = [9, 0], sizes = [8, 128], strides = [1, 1]} : vector<24x128xf32> to vector<8x128xf32>
    %cst_49 = arith.constant 0.00759875821 : f32
    %171 = vector.broadcast %cst_49 : f32 to vector<8x128xf32>
    %172 = arith.mulf %171, %170 : vector<8x128xf32>
    %173 = arith.addf %169, %172 : vector<8x128xf32>
    %174 = vector.extract_strided_slice %134 {offsets = [10, 0], sizes = [8, 128], strides = [1, 1]} : vector<24x128xf32> to vector<8x128xf32>
    %cst_50 = arith.constant 0.00102838012 : f32
    %175 = vector.broadcast %cst_50 : f32 to vector<8x128xf32>
    %176 = arith.mulf %175, %174 : vector<8x128xf32>
    %177 = arith.addf %173, %176 : vector<8x128xf32>
    %178 = arith.mulf %3, %3 : vector<24x138xf32>
    %179 = vector.extract_strided_slice %178 {offsets = [0, 0], sizes = [24, 128], strides = [1, 1]} : vector<24x138xf32> to vector<24x128xf32>
    %cst_51 = arith.constant 0.00102838012 : f32
    %180 = vector.broadcast %cst_51 : f32 to vector<24x128xf32>
    %181 = arith.mulf %180, %179 : vector<24x128xf32>
    %182 = vector.extract_strided_slice %178 {offsets = [0, 1], sizes = [24, 128], strides = [1, 1]} : vector<24x138xf32> to vector<24x128xf32>
    %cst_52 = arith.constant 0.00759875821 : f32
    %183 = vector.broadcast %cst_52 : f32 to vector<24x128xf32>
    %184 = arith.mulf %183, %182 : vector<24x128xf32>
    %185 = arith.addf %181, %184 : vector<24x128xf32>
    %186 = vector.extract_strided_slice %178 {offsets = [0, 2], sizes = [24, 128], strides = [1, 1]} : vector<24x138xf32> to vector<24x128xf32>
    %cst_53 = arith.constant 0.0360007733 : f32
    %187 = vector.broadcast %cst_53 : f32 to vector<24x128xf32>
    %188 = arith.mulf %187, %186 : vector<24x128xf32>
    %189 = arith.addf %185, %188 : vector<24x128xf32>
    %190 = vector.extract_strided_slice %178 {offsets = [0, 3], sizes = [24, 128], strides = [1, 1]} : vector<24x138xf32> to vector<24x128xf32>
    %cst_54 = arith.constant 0.109360687 : f32
    %191 = vector.broadcast %cst_54 : f32 to vector<24x128xf32>
    %192 = arith.mulf %191, %190 : vector<24x128xf32>
    %193 = arith.addf %189, %192 : vector<24x128xf32>
    %194 = vector.extract_strided_slice %178 {offsets = [0, 4], sizes = [24, 128], strides = [1, 1]} : vector<24x138xf32> to vector<24x128xf32>
    %cst_55 = arith.constant 0.213005543 : f32
    %195 = vector.broadcast %cst_55 : f32 to vector<24x128xf32>
    %196 = arith.mulf %195, %194 : vector<24x128xf32>
    %197 = arith.addf %193, %196 : vector<24x128xf32>
    %198 = vector.extract_strided_slice %178 {offsets = [0, 5], sizes = [24, 128], strides = [1, 1]} : vector<24x138xf32> to vector<24x128xf32>
    %cst_56 = arith.constant 0.266011715 : f32
    %199 = vector.broadcast %cst_56 : f32 to vector<24x128xf32>
    %200 = arith.mulf %199, %198 : vector<24x128xf32>
    %201 = arith.addf %197, %200 : vector<24x128xf32>
    %202 = vector.extract_strided_slice %178 {offsets = [0, 6], sizes = [24, 128], strides = [1, 1]} : vector<24x138xf32> to vector<24x128xf32>
    %cst_57 = arith.constant 0.213005543 : f32
    %203 = vector.broadcast %cst_57 : f32 to vector<24x128xf32>
    %204 = arith.mulf %203, %202 : vector<24x128xf32>
    %205 = arith.addf %201, %204 : vector<24x128xf32>
    %206 = vector.extract_strided_slice %178 {offsets = [0, 7], sizes = [24, 128], strides = [1, 1]} : vector<24x138xf32> to vector<24x128xf32>
    %cst_58 = arith.constant 0.109360687 : f32
    %207 = vector.broadcast %cst_58 : f32 to vector<24x128xf32>
    %208 = arith.mulf %207, %206 : vector<24x128xf32>
    %209 = arith.addf %205, %208 : vector<24x128xf32>
    %210 = vector.extract_strided_slice %178 {offsets = [0, 8], sizes = [24, 128], strides = [1, 1]} : vector<24x138xf32> to vector<24x128xf32>
    %cst_59 = arith.constant 0.0360007733 : f32
    %211 = vector.broadcast %cst_59 : f32 to vector<24x128xf32>
    %212 = arith.mulf %211, %210 : vector<24x128xf32>
    %213 = arith.addf %209, %212 : vector<24x128xf32>
    %214 = vector.extract_strided_slice %178 {offsets = [0, 9], sizes = [24, 128], strides = [1, 1]} : vector<24x138xf32> to vector<24x128xf32>
    %cst_60 = arith.constant 0.00759875821 : f32
    %215 = vector.broadcast %cst_60 : f32 to vector<24x128xf32>
    %216 = arith.mulf %215, %214 : vector<24x128xf32>
    %217 = arith.addf %213, %216 : vector<24x128xf32>
    %218 = vector.extract_strided_slice %178 {offsets = [0, 10], sizes = [24, 128], strides = [1, 1]} : vector<24x138xf32> to vector<24x128xf32>
    %cst_61 = arith.constant 0.00102838012 : f32
    %219 = vector.broadcast %cst_61 : f32 to vector<24x128xf32>
    %220 = arith.mulf %219, %218 : vector<24x128xf32>
    %221 = arith.addf %217, %220 : vector<24x128xf32>
    %222 = vector.extract_strided_slice %221 {offsets = [0, 0], sizes = [8, 128], strides = [1, 1]} : vector<24x128xf32> to vector<8x128xf32>
    %cst_62 = arith.constant 0.00102838012 : f32
    %223 = vector.broadcast %cst_62 : f32 to vector<8x128xf32>
    %224 = arith.mulf %223, %222 : vector<8x128xf32>
    %225 = vector.extract_strided_slice %221 {offsets = [1, 0], sizes = [8, 128], strides = [1, 1]} : vector<24x128xf32> to vector<8x128xf32>
    %cst_63 = arith.constant 0.00759875821 : f32
    %226 = vector.broadcast %cst_63 : f32 to vector<8x128xf32>
    %227 = arith.mulf %226, %225 : vector<8x128xf32>
    %228 = arith.addf %224, %227 : vector<8x128xf32>
    %229 = vector.extract_strided_slice %221 {offsets = [2, 0], sizes = [8, 128], strides = [1, 1]} : vector<24x128xf32> to vector<8x128xf32>
    %cst_64 = arith.constant 0.0360007733 : f32
    %230 = vector.broadcast %cst_64 : f32 to vector<8x128xf32>
    %231 = arith.mulf %230, %229 : vector<8x128xf32>
    %232 = arith.addf %228, %231 : vector<8x128xf32>
    %233 = vector.extract_strided_slice %221 {offsets = [3, 0], sizes = [8, 128], strides = [1, 1]} : vector<24x128xf32> to vector<8x128xf32>
    %cst_65 = arith.constant 0.109360687 : f32
    %234 = vector.broadcast %cst_65 : f32 to vector<8x128xf32>
    %235 = arith.mulf %234, %233 : vector<8x128xf32>
    %236 = arith.addf %232, %235 : vector<8x128xf32>
    %237 = vector.extract_strided_slice %221 {offsets = [4, 0], sizes = [8, 128], strides = [1, 1]} : vector<24x128xf32> to vector<8x128xf32>
    %cst_66 = arith.constant 0.213005543 : f32
    %238 = vector.broadcast %cst_66 : f32 to vector<8x128xf32>
    %239 = arith.mulf %238, %237 : vector<8x128xf32>
    %240 = arith.addf %236, %239 : vector<8x128xf32>
    %241 = vector.extract_strided_slice %221 {offsets = [5, 0], sizes = [8, 128], strides = [1, 1]} : vector<24x128xf32> to vector<8x128xf32>
    %cst_67 = arith.constant 0.266011715 : f32
    %242 = vector.broadcast %cst_67 : f32 to vector<8x128xf32>
    %243 = arith.mulf %242, %241 : vector<8x128xf32>
    %244 = arith.addf %240, %243 : vector<8x128xf32>
    %245 = vector.extract_strided_slice %221 {offsets = [6, 0], sizes = [8, 128], strides = [1, 1]} : vector<24x128xf32> to vector<8x128xf32>
    %cst_68 = arith.constant 0.213005543 : f32
    %246 = vector.broadcast %cst_68 : f32 to vector<8x128xf32>
    %247 = arith.mulf %246, %245 : vector<8x128xf32>
    %248 = arith.addf %244, %247 : vector<8x128xf32>
    %249 = vector.extract_strided_slice %221 {offsets = [7, 0], sizes = [8, 128], strides = [1, 1]} : vector<24x128xf32> to vector<8x128xf32>
    %cst_69 = arith.constant 0.109360687 : f32
    %250 = vector.broadcast %cst_69 : f32 to vector<8x128xf32>
    %251 = arith.mulf %250, %249 : vector<8x128xf32>
    %252 = arith.addf %248, %251 : vector<8x128xf32>
    %253 = vector.extract_strided_slice %221 {offsets = [8, 0], sizes = [8, 128], strides = [1, 1]} : vector<24x128xf32> to vector<8x128xf32>
    %cst_70 = arith.constant 0.0360007733 : f32
    %254 = vector.broadcast %cst_70 : f32 to vector<8x128xf32>
    %255 = arith.mulf %254, %253 : vector<8x128xf32>
    %256 = arith.addf %252, %255 : vector<8x128xf32>
    %257 = vector.extract_strided_slice %221 {offsets = [9, 0], sizes = [8, 128], strides = [1, 1]} : vector<24x128xf32> to vector<8x128xf32>
    %cst_71 = arith.constant 0.00759875821 : f32
    %258 = vector.broadcast %cst_71 : f32 to vector<8x128xf32>
    %259 = arith.mulf %258, %257 : vector<8x128xf32>
    %260 = arith.addf %256, %259 : vector<8x128xf32>
    %261 = vector.extract_strided_slice %221 {offsets = [10, 0], sizes = [8, 128], strides = [1, 1]} : vector<24x128xf32> to vector<8x128xf32>
    %cst_72 = arith.constant 0.00102838012 : f32
    %262 = vector.broadcast %cst_72 : f32 to vector<8x128xf32>
    %263 = arith.mulf %262, %261 : vector<8x128xf32>
    %264 = arith.addf %260, %263 : vector<8x128xf32>
    %265 = arith.mulf %5, %5 : vector<24x138xf32>
    %266 = vector.extract_strided_slice %265 {offsets = [0, 0], sizes = [24, 128], strides = [1, 1]} : vector<24x138xf32> to vector<24x128xf32>
    %cst_73 = arith.constant 0.00102838012 : f32
    %267 = vector.broadcast %cst_73 : f32 to vector<24x128xf32>
    %268 = arith.mulf %267, %266 : vector<24x128xf32>
    %269 = vector.extract_strided_slice %265 {offsets = [0, 1], sizes = [24, 128], strides = [1, 1]} : vector<24x138xf32> to vector<24x128xf32>
    %cst_74 = arith.constant 0.00759875821 : f32
    %270 = vector.broadcast %cst_74 : f32 to vector<24x128xf32>
    %271 = arith.mulf %270, %269 : vector<24x128xf32>
    %272 = arith.addf %268, %271 : vector<24x128xf32>
    %273 = vector.extract_strided_slice %265 {offsets = [0, 2], sizes = [24, 128], strides = [1, 1]} : vector<24x138xf32> to vector<24x128xf32>
    %cst_75 = arith.constant 0.0360007733 : f32
    %274 = vector.broadcast %cst_75 : f32 to vector<24x128xf32>
    %275 = arith.mulf %274, %273 : vector<24x128xf32>
    %276 = arith.addf %272, %275 : vector<24x128xf32>
    %277 = vector.extract_strided_slice %265 {offsets = [0, 3], sizes = [24, 128], strides = [1, 1]} : vector<24x138xf32> to vector<24x128xf32>
    %cst_76 = arith.constant 0.109360687 : f32
    %278 = vector.broadcast %cst_76 : f32 to vector<24x128xf32>
    %279 = arith.mulf %278, %277 : vector<24x128xf32>
    %280 = arith.addf %276, %279 : vector<24x128xf32>
    %281 = vector.extract_strided_slice %265 {offsets = [0, 4], sizes = [24, 128], strides = [1, 1]} : vector<24x138xf32> to vector<24x128xf32>
    %cst_77 = arith.constant 0.213005543 : f32
    %282 = vector.broadcast %cst_77 : f32 to vector<24x128xf32>
    %283 = arith.mulf %282, %281 : vector<24x128xf32>
    %284 = arith.addf %280, %283 : vector<24x128xf32>
    %285 = vector.extract_strided_slice %265 {offsets = [0, 5], sizes = [24, 128], strides = [1, 1]} : vector<24x138xf32> to vector<24x128xf32>
    %cst_78 = arith.constant 0.266011715 : f32
    %286 = vector.broadcast %cst_78 : f32 to vector<24x128xf32>
    %287 = arith.mulf %286, %285 : vector<24x128xf32>
    %288 = arith.addf %284, %287 : vector<24x128xf32>
    %289 = vector.extract_strided_slice %265 {offsets = [0, 6], sizes = [24, 128], strides = [1, 1]} : vector<24x138xf32> to vector<24x128xf32>
    %cst_79 = arith.constant 0.213005543 : f32
    %290 = vector.broadcast %cst_79 : f32 to vector<24x128xf32>
    %291 = arith.mulf %290, %289 : vector<24x128xf32>
    %292 = arith.addf %288, %291 : vector<24x128xf32>
    %293 = vector.extract_strided_slice %265 {offsets = [0, 7], sizes = [24, 128], strides = [1, 1]} : vector<24x138xf32> to vector<24x128xf32>
    %cst_80 = arith.constant 0.109360687 : f32
    %294 = vector.broadcast %cst_80 : f32 to vector<24x128xf32>
    %295 = arith.mulf %294, %293 : vector<24x128xf32>
    %296 = arith.addf %292, %295 : vector<24x128xf32>
    %297 = vector.extract_strided_slice %265 {offsets = [0, 8], sizes = [24, 128], strides = [1, 1]} : vector<24x138xf32> to vector<24x128xf32>
    %cst_81 = arith.constant 0.0360007733 : f32
    %298 = vector.broadcast %cst_81 : f32 to vector<24x128xf32>
    %299 = arith.mulf %298, %297 : vector<24x128xf32>
    %300 = arith.addf %296, %299 : vector<24x128xf32>
    %301 = vector.extract_strided_slice %265 {offsets = [0, 9], sizes = [24, 128], strides = [1, 1]} : vector<24x138xf32> to vector<24x128xf32>
    %cst_82 = arith.constant 0.00759875821 : f32
    %302 = vector.broadcast %cst_82 : f32 to vector<24x128xf32>
    %303 = arith.mulf %302, %301 : vector<24x128xf32>
    %304 = arith.addf %300, %303 : vector<24x128xf32>
    %305 = vector.extract_strided_slice %265 {offsets = [0, 10], sizes = [24, 128], strides = [1, 1]} : vector<24x138xf32> to vector<24x128xf32>
    %cst_83 = arith.constant 0.00102838012 : f32
    %306 = vector.broadcast %cst_83 : f32 to vector<24x128xf32>
    %307 = arith.mulf %306, %305 : vector<24x128xf32>
    %308 = arith.addf %304, %307 : vector<24x128xf32>
    %309 = vector.extract_strided_slice %308 {offsets = [0, 0], sizes = [8, 128], strides = [1, 1]} : vector<24x128xf32> to vector<8x128xf32>
    %cst_84 = arith.constant 0.00102838012 : f32
    %310 = vector.broadcast %cst_84 : f32 to vector<8x128xf32>
    %311 = arith.mulf %310, %309 : vector<8x128xf32>
    %312 = vector.extract_strided_slice %308 {offsets = [1, 0], sizes = [8, 128], strides = [1, 1]} : vector<24x128xf32> to vector<8x128xf32>
    %cst_85 = arith.constant 0.00759875821 : f32
    %313 = vector.broadcast %cst_85 : f32 to vector<8x128xf32>
    %314 = arith.mulf %313, %312 : vector<8x128xf32>
    %315 = arith.addf %311, %314 : vector<8x128xf32>
    %316 = vector.extract_strided_slice %308 {offsets = [2, 0], sizes = [8, 128], strides = [1, 1]} : vector<24x128xf32> to vector<8x128xf32>
    %cst_86 = arith.constant 0.0360007733 : f32
    %317 = vector.broadcast %cst_86 : f32 to vector<8x128xf32>
    %318 = arith.mulf %317, %316 : vector<8x128xf32>
    %319 = arith.addf %315, %318 : vector<8x128xf32>
    %320 = vector.extract_strided_slice %308 {offsets = [3, 0], sizes = [8, 128], strides = [1, 1]} : vector<24x128xf32> to vector<8x128xf32>
    %cst_87 = arith.constant 0.109360687 : f32
    %321 = vector.broadcast %cst_87 : f32 to vector<8x128xf32>
    %322 = arith.mulf %321, %320 : vector<8x128xf32>
    %323 = arith.addf %319, %322 : vector<8x128xf32>
    %324 = vector.extract_strided_slice %308 {offsets = [4, 0], sizes = [8, 128], strides = [1, 1]} : vector<24x128xf32> to vector<8x128xf32>
    %cst_88 = arith.constant 0.213005543 : f32
    %325 = vector.broadcast %cst_88 : f32 to vector<8x128xf32>
    %326 = arith.mulf %325, %324 : vector<8x128xf32>
    %327 = arith.addf %323, %326 : vector<8x128xf32>
    %328 = vector.extract_strided_slice %308 {offsets = [5, 0], sizes = [8, 128], strides = [1, 1]} : vector<24x128xf32> to vector<8x128xf32>
    %cst_89 = arith.constant 0.266011715 : f32
    %329 = vector.broadcast %cst_89 : f32 to vector<8x128xf32>
    %330 = arith.mulf %329, %328 : vector<8x128xf32>
    %331 = arith.addf %327, %330 : vector<8x128xf32>
    %332 = vector.extract_strided_slice %308 {offsets = [6, 0], sizes = [8, 128], strides = [1, 1]} : vector<24x128xf32> to vector<8x128xf32>
    %cst_90 = arith.constant 0.213005543 : f32
    %333 = vector.broadcast %cst_90 : f32 to vector<8x128xf32>
    %334 = arith.mulf %333, %332 : vector<8x128xf32>
    %335 = arith.addf %331, %334 : vector<8x128xf32>
    %336 = vector.extract_strided_slice %308 {offsets = [7, 0], sizes = [8, 128], strides = [1, 1]} : vector<24x128xf32> to vector<8x128xf32>
    %cst_91 = arith.constant 0.109360687 : f32
    %337 = vector.broadcast %cst_91 : f32 to vector<8x128xf32>
    %338 = arith.mulf %337, %336 : vector<8x128xf32>
    %339 = arith.addf %335, %338 : vector<8x128xf32>
    %340 = vector.extract_strided_slice %308 {offsets = [8, 0], sizes = [8, 128], strides = [1, 1]} : vector<24x128xf32> to vector<8x128xf32>
    %cst_92 = arith.constant 0.0360007733 : f32
    %341 = vector.broadcast %cst_92 : f32 to vector<8x128xf32>
    %342 = arith.mulf %341, %340 : vector<8x128xf32>
    %343 = arith.addf %339, %342 : vector<8x128xf32>
    %344 = vector.extract_strided_slice %308 {offsets = [9, 0], sizes = [8, 128], strides = [1, 1]} : vector<24x128xf32> to vector<8x128xf32>
    %cst_93 = arith.constant 0.00759875821 : f32
    %345 = vector.broadcast %cst_93 : f32 to vector<8x128xf32>
    %346 = arith.mulf %345, %344 : vector<8x128xf32>
    %347 = arith.addf %343, %346 : vector<8x128xf32>
    %348 = vector.extract_strided_slice %308 {offsets = [10, 0], sizes = [8, 128], strides = [1, 1]} : vector<24x128xf32> to vector<8x128xf32>
    %cst_94 = arith.constant 0.00102838012 : f32
    %349 = vector.broadcast %cst_94 : f32 to vector<8x128xf32>
    %350 = arith.mulf %349, %348 : vector<8x128xf32>
    %351 = arith.addf %347, %350 : vector<8x128xf32>
    %352 = arith.mulf %3, %5 : vector<24x138xf32>
    %353 = vector.extract_strided_slice %352 {offsets = [0, 0], sizes = [24, 128], strides = [1, 1]} : vector<24x138xf32> to vector<24x128xf32>
    %cst_95 = arith.constant 0.00102838012 : f32
    %354 = vector.broadcast %cst_95 : f32 to vector<24x128xf32>
    %355 = arith.mulf %354, %353 : vector<24x128xf32>
    %356 = vector.extract_strided_slice %352 {offsets = [0, 1], sizes = [24, 128], strides = [1, 1]} : vector<24x138xf32> to vector<24x128xf32>
    %cst_96 = arith.constant 0.00759875821 : f32
    %357 = vector.broadcast %cst_96 : f32 to vector<24x128xf32>
    %358 = arith.mulf %357, %356 : vector<24x128xf32>
    %359 = arith.addf %355, %358 : vector<24x128xf32>
    %360 = vector.extract_strided_slice %352 {offsets = [0, 2], sizes = [24, 128], strides = [1, 1]} : vector<24x138xf32> to vector<24x128xf32>
    %cst_97 = arith.constant 0.0360007733 : f32
    %361 = vector.broadcast %cst_97 : f32 to vector<24x128xf32>
    %362 = arith.mulf %361, %360 : vector<24x128xf32>
    %363 = arith.addf %359, %362 : vector<24x128xf32>
    %364 = vector.extract_strided_slice %352 {offsets = [0, 3], sizes = [24, 128], strides = [1, 1]} : vector<24x138xf32> to vector<24x128xf32>
    %cst_98 = arith.constant 0.109360687 : f32
    %365 = vector.broadcast %cst_98 : f32 to vector<24x128xf32>
    %366 = arith.mulf %365, %364 : vector<24x128xf32>
    %367 = arith.addf %363, %366 : vector<24x128xf32>
    %368 = vector.extract_strided_slice %352 {offsets = [0, 4], sizes = [24, 128], strides = [1, 1]} : vector<24x138xf32> to vector<24x128xf32>
    %cst_99 = arith.constant 0.213005543 : f32
    %369 = vector.broadcast %cst_99 : f32 to vector<24x128xf32>
    %370 = arith.mulf %369, %368 : vector<24x128xf32>
    %371 = arith.addf %367, %370 : vector<24x128xf32>
    %372 = vector.extract_strided_slice %352 {offsets = [0, 5], sizes = [24, 128], strides = [1, 1]} : vector<24x138xf32> to vector<24x128xf32>
    %cst_100 = arith.constant 0.266011715 : f32
    %373 = vector.broadcast %cst_100 : f32 to vector<24x128xf32>
    %374 = arith.mulf %373, %372 : vector<24x128xf32>
    %375 = arith.addf %371, %374 : vector<24x128xf32>
    %376 = vector.extract_strided_slice %352 {offsets = [0, 6], sizes = [24, 128], strides = [1, 1]} : vector<24x138xf32> to vector<24x128xf32>
    %cst_101 = arith.constant 0.213005543 : f32
    %377 = vector.broadcast %cst_101 : f32 to vector<24x128xf32>
    %378 = arith.mulf %377, %376 : vector<24x128xf32>
    %379 = arith.addf %375, %378 : vector<24x128xf32>
    %380 = vector.extract_strided_slice %352 {offsets = [0, 7], sizes = [24, 128], strides = [1, 1]} : vector<24x138xf32> to vector<24x128xf32>
    %cst_102 = arith.constant 0.109360687 : f32
    %381 = vector.broadcast %cst_102 : f32 to vector<24x128xf32>
    %382 = arith.mulf %381, %380 : vector<24x128xf32>
    %383 = arith.addf %379, %382 : vector<24x128xf32>
    %384 = vector.extract_strided_slice %352 {offsets = [0, 8], sizes = [24, 128], strides = [1, 1]} : vector<24x138xf32> to vector<24x128xf32>
    %cst_103 = arith.constant 0.0360007733 : f32
    %385 = vector.broadcast %cst_103 : f32 to vector<24x128xf32>
    %386 = arith.mulf %385, %384 : vector<24x128xf32>
    %387 = arith.addf %383, %386 : vector<24x128xf32>
    %388 = vector.extract_strided_slice %352 {offsets = [0, 9], sizes = [24, 128], strides = [1, 1]} : vector<24x138xf32> to vector<24x128xf32>
    %cst_104 = arith.constant 0.00759875821 : f32
    %389 = vector.broadcast %cst_104 : f32 to vector<24x128xf32>
    %390 = arith.mulf %389, %388 : vector<24x128xf32>
    %391 = arith.addf %387, %390 : vector<24x128xf32>
    %392 = vector.extract_strided_slice %352 {offsets = [0, 10], sizes = [24, 128], strides = [1, 1]} : vector<24x138xf32> to vector<24x128xf32>
    %cst_105 = arith.constant 0.00102838012 : f32
    %393 = vector.broadcast %cst_105 : f32 to vector<24x128xf32>
    %394 = arith.mulf %393, %392 : vector<24x128xf32>
    %395 = arith.addf %391, %394 : vector<24x128xf32>
    %396 = vector.extract_strided_slice %395 {offsets = [0, 0], sizes = [8, 128], strides = [1, 1]} : vector<24x128xf32> to vector<8x128xf32>
    %cst_106 = arith.constant 0.00102838012 : f32
    %397 = vector.broadcast %cst_106 : f32 to vector<8x128xf32>
    %398 = arith.mulf %397, %396 : vector<8x128xf32>
    %399 = vector.extract_strided_slice %395 {offsets = [1, 0], sizes = [8, 128], strides = [1, 1]} : vector<24x128xf32> to vector<8x128xf32>
    %cst_107 = arith.constant 0.00759875821 : f32
    %400 = vector.broadcast %cst_107 : f32 to vector<8x128xf32>
    %401 = arith.mulf %400, %399 : vector<8x128xf32>
    %402 = arith.addf %398, %401 : vector<8x128xf32>
    %403 = vector.extract_strided_slice %395 {offsets = [2, 0], sizes = [8, 128], strides = [1, 1]} : vector<24x128xf32> to vector<8x128xf32>
    %cst_108 = arith.constant 0.0360007733 : f32
    %404 = vector.broadcast %cst_108 : f32 to vector<8x128xf32>
    %405 = arith.mulf %404, %403 : vector<8x128xf32>
    %406 = arith.addf %402, %405 : vector<8x128xf32>
    %407 = vector.extract_strided_slice %395 {offsets = [3, 0], sizes = [8, 128], strides = [1, 1]} : vector<24x128xf32> to vector<8x128xf32>
    %cst_109 = arith.constant 0.109360687 : f32
    %408 = vector.broadcast %cst_109 : f32 to vector<8x128xf32>
    %409 = arith.mulf %408, %407 : vector<8x128xf32>
    %410 = arith.addf %406, %409 : vector<8x128xf32>
    %411 = vector.extract_strided_slice %395 {offsets = [4, 0], sizes = [8, 128], strides = [1, 1]} : vector<24x128xf32> to vector<8x128xf32>
    %cst_110 = arith.constant 0.213005543 : f32
    %412 = vector.broadcast %cst_110 : f32 to vector<8x128xf32>
    %413 = arith.mulf %412, %411 : vector<8x128xf32>
    %414 = arith.addf %410, %413 : vector<8x128xf32>
    %415 = vector.extract_strided_slice %395 {offsets = [5, 0], sizes = [8, 128], strides = [1, 1]} : vector<24x128xf32> to vector<8x128xf32>
    %cst_111 = arith.constant 0.266011715 : f32
    %416 = vector.broadcast %cst_111 : f32 to vector<8x128xf32>
    %417 = arith.mulf %416, %415 : vector<8x128xf32>
    %418 = arith.addf %414, %417 : vector<8x128xf32>
    %419 = vector.extract_strided_slice %395 {offsets = [6, 0], sizes = [8, 128], strides = [1, 1]} : vector<24x128xf32> to vector<8x128xf32>
    %cst_112 = arith.constant 0.213005543 : f32
    %420 = vector.broadcast %cst_112 : f32 to vector<8x128xf32>
    %421 = arith.mulf %420, %419 : vector<8x128xf32>
    %422 = arith.addf %418, %421 : vector<8x128xf32>
    %423 = vector.extract_strided_slice %395 {offsets = [7, 0], sizes = [8, 128], strides = [1, 1]} : vector<24x128xf32> to vector<8x128xf32>
    %cst_113 = arith.constant 0.109360687 : f32
    %424 = vector.broadcast %cst_113 : f32 to vector<8x128xf32>
    %425 = arith.mulf %424, %423 : vector<8x128xf32>
    %426 = arith.addf %422, %425 : vector<8x128xf32>
    %427 = vector.extract_strided_slice %395 {offsets = [8, 0], sizes = [8, 128], strides = [1, 1]} : vector<24x128xf32> to vector<8x128xf32>
    %cst_114 = arith.constant 0.0360007733 : f32
    %428 = vector.broadcast %cst_114 : f32 to vector<8x128xf32>
    %429 = arith.mulf %428, %427 : vector<8x128xf32>
    %430 = arith.addf %426, %429 : vector<8x128xf32>
    %431 = vector.extract_strided_slice %395 {offsets = [9, 0], sizes = [8, 128], strides = [1, 1]} : vector<24x128xf32> to vector<8x128xf32>
    %cst_115 = arith.constant 0.00759875821 : f32
    %432 = vector.broadcast %cst_115 : f32 to vector<8x128xf32>
    %433 = arith.mulf %432, %431 : vector<8x128xf32>
    %434 = arith.addf %430, %433 : vector<8x128xf32>
    %435 = vector.extract_strided_slice %395 {offsets = [10, 0], sizes = [8, 128], strides = [1, 1]} : vector<24x128xf32> to vector<8x128xf32>
    %cst_116 = arith.constant 0.00102838012 : f32
    %436 = vector.broadcast %cst_116 : f32 to vector<8x128xf32>
    %437 = arith.mulf %436, %435 : vector<8x128xf32>
    %438 = arith.addf %434, %437 : vector<8x128xf32>
    %439 = arith.mulf %91, %91 : vector<8x128xf32>
    %440 = arith.mulf %177, %177 : vector<8x128xf32>
    %441 = arith.mulf %91, %177 : vector<8x128xf32>
    %442 = arith.subf %264, %439 : vector<8x128xf32>
    %443 = arith.subf %351, %440 : vector<8x128xf32>
    %444 = arith.subf %438, %441 : vector<8x128xf32>
    %cst_117 = arith.constant 2.000000e+00 : f32
    %445 = vector.broadcast %cst_117 : f32 to vector<8x128xf32>
    %446 = arith.mulf %445, %444 : vector<8x128xf32>
    %447 = vector.broadcast %1 : f32 to vector<8x128xf32>
    %448 = arith.addf %446, %447 : vector<8x128xf32>
    %449 = arith.addf %442, %443 : vector<8x128xf32>
    %450 = vector.broadcast %1 : f32 to vector<8x128xf32>
    %451 = arith.addf %449, %450 : vector<8x128xf32>
    %cst_118 = arith.constant 2.000000e+00 : f32
    %452 = vector.broadcast %cst_118 : f32 to vector<8x128xf32>
    %453 = arith.mulf %452, %441 : vector<8x128xf32>
    %454 = vector.broadcast %0 : f32 to vector<8x128xf32>
    %455 = arith.addf %453, %454 : vector<8x128xf32>
    %456 = arith.mulf %455, %448 : vector<8x128xf32>
    %457 = arith.addf %439, %440 : vector<8x128xf32>
    %458 = vector.broadcast %0 : f32 to vector<8x128xf32>
    %459 = arith.addf %457, %458 : vector<8x128xf32>
    %460 = arith.mulf %459, %451 : vector<8x128xf32>
    %461 = tpu.reciprocal %460 {approx = true} : vector<8x128xf32> -> vector<8x128xf32>
    %462 = arith.mulf %460, %461 : vector<8x128xf32>
    %cst_119 = arith.constant 2.000000e+00 : f32
    %463 = vector.broadcast %cst_119 : f32 to vector<8x128xf32>
    %464 = arith.subf %463, %462 : vector<8x128xf32>
    %465 = arith.mulf %461, %464 : vector<8x128xf32>
    %466 = arith.mulf %456, %465 : vector<8x128xf32>
    %c8_i32 = arith.constant 8 : i32
    %467 = arith.muli %arg1, %c8_i32 : i32
    %c6_i32 = arith.constant 6 : i32
    %468 = arith.subi %c6_i32, %467 : i32
    %469 = tpu.iota {dimensions = array<i32: 0>} : vector<8x128xi32>
    %470 = tpu.iota {dimensions = array<i32: 1>} : vector<8x128xi32>
    %471 = vector.broadcast %468 : i32 to vector<8x128xi32>
    %472 = arith.cmpi slt, %469, %471 : vector<8x128xi32>
    %c6_i32_120 = arith.constant 6 : i32
    %473 = vector.broadcast %c6_i32_120 : i32 to vector<8x128xi32>
    %474 = arith.cmpi slt, %470, %473 : vector<8x128xi32>
    %475 = arith.andi %472, %474 : vector<8x128xi1>
    %cst_121 = arith.constant 0.000000e+00 : f32
    %476 = vector.broadcast %cst_121 : f32 to vector<8x128xf32>
    %477 = arith.select %475, %466, %476 : vector<8x128xi1>, vector<8x128xf32>
    %478 = vector.shape_cast %477 : vector<8x128xf32> to vector<1x8x128xf32>
    %cst_122 = arith.constant dense<0.000000e+00> : vector<1xf32>
    %479 = vector.multi_reduction <add>, %478, %cst_122 [1, 2] : vector<1x8x128xf32> to vector<1xf32>
    %480 = vector.shape_cast %479 : vector<1xf32> to vector<1x1x1xf32>
    %481 = vector.extract %480[0, 0, 0] : f32 from vector<1x1x1xf32>
    %c0_i32 = arith.constant 0 : i32
    %482 = arith.cmpi eq, %arg1, %c0_i32 : i32
    %483 = arith.extui %482 : i1 to i32
    %c0_i32_123 = arith.constant 0 : i32
    %484 = arith.cmpi ne, %483, %c0_i32_123 : i32
    scf.if %484 {
      %cst_130 = arith.constant 0.000000e+00 : f32
      %489 = vector.broadcast %cst_130 : f32 to vector<1x1x1xf32>
      %c0_131 = arith.constant 0 : index
      %c0_132 = arith.constant 0 : index
      %c0_133 = arith.constant 0 : index
      %490 = vector.load %arg5[%c0_131, %c0_132, %c0_133] : memref<1x1x1xf32, #tpu.memory_space<vmem>>, vector<1x1x1xf32>
      tpu.vector_store %arg5[%c0_131, %c0_132, %c0_133], %489 {strides = array<i32>} : memref<1x1x1xf32, #tpu.memory_space<vmem>>, vector<1x1x1xf32>,
    } else {
    }
    %c0_124 = arith.constant 0 : index
    %c0_125 = arith.constant 0 : index
    %c0_126 = arith.constant 0 : index
    %485 = vector.load %arg5[%c0_124, %c0_125, %c0_126] : memref<1x1x1xf32, #tpu.memory_space<vmem>>, vector<1x1x1xf32>
    %486 = vector.broadcast %481 : f32 to vector<1x1x1xf32>
    %487 = arith.addf %485, %486 : vector<1x1x1xf32>
    %c0_127 = arith.constant 0 : index
    %c0_128 = arith.constant 0 : index
    %c0_129 = arith.constant 0 : index
    %488 = vector.load %arg5[%c0_127, %c0_128, %c0_129] : memref<1x1x1xf32, #tpu.memory_space<vmem>>, vector<1x1x1xf32>
    tpu.vector_store %arg5[%c0_127, %c0_128, %c0_129], %487 {strides = array<i32>} : memref<1x1x1xf32, #tpu.memory_space<vmem>>, vector<1x1x1xf32>,
    return
  }
  func.func @transform_0(%arg0: i32, %arg1: i32) -> i32 {
    %c0_i32 = arith.constant 0 : i32
    %c0_i32_0 = arith.constant 0 : i32
    return %c0_i32 : i32
  }
  func.func @transform_1(%arg0: i32, %arg1: i32) -> (i32, i32, i32, i32) {
    %c0_i32 = arith.constant 0 : i32
    %c0_i32_0 = arith.constant 0 : i32
    %c0_i32_1 = arith.constant 0 : i32
    return %arg0, %arg1, %c0_i32, %c0_i32_0 : i32, i32, i32, i32
  }
  func.func @transform_2(%arg0: i32, %arg1: i32) -> (i32, i32, i32, i32) {
    %c0_i32 = arith.constant 0 : i32
    %c0_i32_0 = arith.constant 0 : i32
    %c0_i32_1 = arith.constant 0 : i32
    return %arg0, %arg1, %c0_i32, %c0_i32_0 : i32, i32, i32, i32
  }
  func.func @transform_3(%arg0: i32, %arg1: i32) -> (i32, i32, i32) {
    %c0_i32 = arith.constant 0 : i32
    %c0_i32_0 = arith.constant 0 : i32
    %c0_i32_1 = arith.constant 0 : i32
    return %arg0, %c0_i32, %c0_i32_0 : i32, i32, i32
  }
}

</mosaic_0001>

<llo_original>
// kernel: tpu_custom_call.1
$region0: #{tpu_custom_call.1}
  #allocation0 [shape = 'u32[]', space=smem, size = 0x4, offset = 0x4, fixed_abs, tag = 'smem constant byte address 0x4 - core index']
  #allocation1 [shape = 'u32[144,128]{1,0:T(1,128)}', space=vmem, size = 0x12000, scoped, tag = 'internal scratch']
  %s0 = inlined_call_operand.hbm [shape: f32[2], index: 0, kind: input, shape index: {}]
  %s1 = inlined_call_operand.hbm [shape: f32[6,1,24,138], index: 1, kind: input, shape index: {}]
  %s2 = inlined_call_operand.hbm [shape: f32[6,1,24,138], index: 2, kind: input, shape index: {}]
  %s3 = inlined_call_operand.vmem [shape: f32[6,1,1], index: 3, kind: output, shape index: {}]
  %s4 = sld [smem:[#allocation0]]
  $region61: #{tpu_custom_call.1} parent=0
    _
  %s6 = ssub.s32 1, %s4
  %s7 = scalar_select 0, %s6, %s4
  $region1: #{tpu_custom_call.1} parent=0
    #allocation2 [shape = 'u8[512]{0}', space=smem, size = 0x200, scoped, tag = 'input window, operand 0, single buffered']
    #allocation3 [shape = 's32[2]{0}', space=sflag, size = 0x8, scoped, tag = 'scoped memory for tpu_custom_call.1']
    #allocation4 [shape = 's32[2]{0}', space=sflag, size = 0x8, scoped, tag = 'scoped memory for tpu_custom_call.1']
    #allocation5 [shape = 'u8[49152]{0}', space=vmem, size = 0xc000, scoped, tag = 'input window, operand 1']
    #allocation6 [shape = 'u8[49152]{0}', space=vmem, size = 0xc000, scoped, tag = 'input window, operand 2']
    #allocation7 [shape = 's32[2]{0}', space=sflag, size = 0x8, scoped, tag = 'scoped memory for tpu_custom_call.1']
    %8 = vsyncpa [#allocation4], 0
    %9 = vsyncpa [#allocation3], 0
    %s10 = scalar_lea.sflag [#allocation3], 1
    %11 = vsyncpa %s10, 0
    %12 = vsyncpa [#allocation7], 0
    %s13 = scalar_lea.sflag [#allocation7], 1
    %14 = vsyncpa %s13, 0
    loop: start=0, step=1, limit=8
    $region2: #{tpu_custom_call.1} parent=1 // loop_pre_header
      _
    $region3: #{tpu_custom_call.1} parent=1 // loop_header
      %s16 = sphi 0, %s20
      %p17 = scmp.ge.s32.totalorder %s16, 8
      %s23 = sphi 0, %s35
      %s24 = sphi 0, %s31
      %s25 = sphi 0, %s23
      %s26 = sphi 0, %s24
      %s27 = sphi 0, %s25
      %s28 = sphi 0, %s26
      %s36 = sphi 0, %s36
      %s38 = sphi 0, %s36
      %s39 = sphi 0, %s38
      %s53 = sphi 0, %s39
      %s61 = sphi 0, %s63
      %s64 = sphi 0, %s61
      %s65 = sphi 0, %s64
      %s81 = sphi 0, %s65
      %s89 = sphi 0, %s91
      %s92 = sphi 0, %s89
      %s93 = sphi 0, %s92
      %s109 = sphi 0, %s93
      %s115 = sphi 0, %s117
      %s118 = sphi 0, %s115
      %s119 = sphi 0, %s118
      %s135 = sphi 0, %s119
    $region4: #{tpu_custom_call.1} parent=1 // loop_header_branch
      %19 = sbr.rel (%p17) target = $region8
    $region5: #{tpu_custom_call.1} parent=1 // loop_body
      %s21 = ssub.s32 %s16, 1
      %s22 = ssub.s32 %s16, 2
      %s29 = sadd.s32 1, %s24
      %p30 = scmp.ge.s32.totalorder %s29, 1
      %s31 = scalar_select %p30, 0, %s29
      %s32 = sadd.s32 1, %s23
      %s33 = scalar_select %p30, %s32, %s23
      %p34 = scmp.ge.s32.totalorder %s33, 6
      %s35 = scalar_select %p34, 0, %s33
      %s37 = sadd.s32 %s36, 1
      %p40 = scmp.eq.s32.totalorder %s16, 5
      %p41 = scmp.ne.s32.totalorder %s36, %s38
      %p42 = scmp.eq.s32.totalorder %s16, 0
      %p43 = por %p41, %p42
      %p44 = scmp.ne.s32.totalorder %s36, %s38
      %p45 = scmp.eq.s32.totalorder %s21, 5
      %p46 = por %p44, %p45
      %p47 = scmp.ne.s32.totalorder %s38, %s39
      %p48 = scmp.eq.s32.totalorder %s21, 0
      %p49 = por %p47, %p48
      %p50 = scmp.ne.s32.totalorder %s38, %s39
      %p51 = scmp.eq.s32.totalorder %s22, 5
      %p52 = por %p50, %p51
      %p54 = scmp.ne.s32.totalorder %s39, %s53
      %p55 = scmp.eq.s32.totalorder %s22, 0
      %p56 = por %p54, %p55
      %s57 = ssub.s32 %s23, %s35
      %s58 = ssub.s32 %s24, %s31
      %s59 = sor.u32 %s57, %s58
      %p60 = scmp.eq.s32.totalorder %s59, 0
      %s62 = sadd.s32 %s61, 1
      %s63 = scalar_select %p60, %s61, %s62
      %p66 = pneg %p60
      %p67 = scmp.eq.s32.totalorder %s16, 5
      %p68 = por %p66, %p67
      %p69 = scmp.ne.s32.totalorder %s61, %s64
      %p70 = scmp.eq.s32.totalorder %s16, 0
      %p71 = por %p69, %p70
      %p72 = scmp.ne.s32.totalorder %s61, %s64
      %p73 = scmp.eq.s32.totalorder %s21, 5
      %p74 = por %p72, %p73
      %p75 = scmp.ne.s32.totalorder %s64, %s65
      %p76 = scmp.eq.s32.totalorder %s21, 0
      %p77 = por %p75, %p76
      %p78 = scmp.ne.s32.totalorder %s64, %s65
      %p79 = scmp.eq.s32.totalorder %s22, 5
      %p80 = por %p78, %p79
      %p82 = scmp.ne.s32.totalorder %s65, %s81
      %p83 = scmp.eq.s32.totalorder %s22, 0
      %p84 = por %p82, %p83
      %s85 = ssub.s32 %s23, %s35
      %s86 = ssub.s32 %s24, %s31
      %s87 = sor.u32 %s85, %s86
      %p88 = scmp.eq.s32.totalorder %s87, 0
      %s90 = sadd.s32 %s89, 1
      %s91 = scalar_select %p88, %s89, %s90
      %p94 = pneg %p88
      %p95 = scmp.eq.s32.totalorder %s16, 5
      %p96 = por %p94, %p95
      %p97 = scmp.ne.s32.totalorder %s89, %s92
      %p98 = scmp.eq.s32.totalorder %s16, 0
      %p99 = por %p97, %p98
      %p100 = scmp.ne.s32.totalorder %s89, %s92
      %p101 = scmp.eq.s32.totalorder %s21, 5
      %p102 = por %p100, %p101
      %p103 = scmp.ne.s32.totalorder %s92, %s93
      %p104 = scmp.eq.s32.totalorder %s21, 0
      %p105 = por %p103, %p104
      %p106 = scmp.ne.s32.totalorder %s92, %s93
      %p107 = scmp.eq.s32.totalorder %s22, 5
      %p108 = por %p106, %p107
      %p110 = scmp.ne.s32.totalorder %s93, %s109
      %p111 = scmp.eq.s32.totalorder %s22, 0
      %p112 = por %p110, %p111
      %s113 = ssub.s32 %s23, %s35
      %p114 = scmp.eq.s32.totalorder %s113, 0
      %s116 = sadd.s32 %s115, 1
      %s117 = scalar_select %p114, %s115, %s116
      %p120 = pneg %p114
      %p121 = scmp.eq.s32.totalorder %s16, 5
      %p122 = por %p120, %p121
      %p123 = scmp.ne.s32.totalorder %s115, %s118
      %p124 = scmp.eq.s32.totalorder %s16, 0
      %p125 = por %p123, %p124
      %p126 = scmp.ne.s32.totalorder %s115, %s118
      %p127 = scmp.eq.s32.totalorder %s21, 5
      %p128 = por %p126, %p127
      %p129 = scmp.ne.s32.totalorder %s118, %s119
      %p130 = scmp.eq.s32.totalorder %s21, 0
      %p131 = por %p129, %p130
      %p132 = scmp.ne.s32.totalorder %s118, %s119
      %p133 = scmp.eq.s32.totalorder %s22, 5
      %p134 = por %p132, %p133
      %p136 = scmp.ne.s32.totalorder %s119, %s135
      %p137 = scmp.eq.s32.totalorder %s22, 0
      %p138 = por %p136, %p137
      %p139 = scmp.le.s32.totalorder 1, %s16
      %p140 = scmp.lt.s32.totalorder %s16, 7
      %p141 = pnand %p139, %p140
      %p142 = pneg %p141
      // Predicated region
      $region9: #{tpu_custom_call.1} parent=5 // pred_check
        _
      $region10: #{tpu_custom_call.1} parent=5 // pred_check_branch
        %144 = sbr.rel (%p141) target = $region12
      $region11: #{tpu_custom_call.1} parent=5 // pred_region
        %s145 = ssub.s32 %s16, 1
        // Predicated region
        $region13: #{tpu_custom_call.1} parent=11 // pred_check
          %p146 = pneg %p49
        $region14: #{tpu_custom_call.1} parent=11 // pred_check_branch
          %148 = sbr.rel (%p146) target = $region16
        $region15: #{tpu_custom_call.1} parent=11 // pred_region
          %s150 = ssub.s32 16, 16
          %151 = vsyncadd [#allocation4], %s150
          %154 = dma.hbm_to_smem %s0, 16, [#allocation2], [#allocation4]
        $region16: #{tpu_custom_call.1} parent=11 // pred_fallthru
          _
      $region12: #{tpu_custom_call.1} parent=5 // pred_fallthru
        _
      %p155 = scmp.lt.s32.totalorder %s16, 6
      // Predicated region
      $region17: #{tpu_custom_call.1} parent=5 // pred_check
        %p156 = pneg %p155
      $region18: #{tpu_custom_call.1} parent=5 // pred_check_branch
        %158 = sbr.rel (%p156) target = $region20
      $region19: #{tpu_custom_call.1} parent=5 // pred_region
        // Predicated region
        $region21: #{tpu_custom_call.1} parent=19 // pred_check
          %p159 = pneg %p71
        $region22: #{tpu_custom_call.1} parent=19 // pred_check_branch
          %161 = sbr.rel (%p159) target = $region24
        $region23: #{tpu_custom_call.1} parent=19 // pred_region
          %s162 = sand.u32 %s61, 1
          %s163 = scalar_lea.sflag [#allocation3], %s162
          %s164 = sand.u32 %s61, 1
          %s165 = smul.addr %s164, 48
          %s166 = scalar_lea.vmem [#allocation5], %s165
          %s168 = ssub.s32 768, 768
          %169 = vsyncadd %s163, %s168
          %s170 = smul.addr %s24, 6
          %s171 = smul.addr %s23, 6
          %s172 = sadd.s32 %s170, %s171
          %s173 = smul.addr %s172, 128
          %s174 = scalar_lea.hbm %s1, %s173
          %s175 = sshll.u32 %s166, 4
          %s176 = int_to_ptr.vmem [resolvable:$true] %s175
          %181 = dma.hbm_to_vmem [thread:$0]  %s174, 768, %s176, %s163, 256, 256, 16
        $region24: #{tpu_custom_call.1} parent=19 // pred_fallthru
          _
        // Predicated region
        $region25: #{tpu_custom_call.1} parent=19 // pred_check
          %p182 = pneg %p99
        $region26: #{tpu_custom_call.1} parent=19 // pred_check_branch
          %184 = sbr.rel (%p182) target = $region28
        $region27: #{tpu_custom_call.1} parent=19 // pred_region
          %s185 = sand.u32 %s89, 1
          %s186 = scalar_lea.sflag [#allocation7], %s185
          %s187 = sand.u32 %s89, 1
          %s188 = smul.addr %s187, 48
          %s189 = scalar_lea.vmem [#allocation6], %s188
          %s191 = ssub.s32 768, 768
          %192 = vsyncadd %s186, %s191
          %s193 = smul.addr %s24, 6
          %s194 = smul.addr %s23, 6
          %s195 = sadd.s32 %s193, %s194
          %s196 = smul.addr %s195, 128
          %s197 = scalar_lea.hbm %s2, %s196
          %s198 = sshll.u32 %s189, 4
          %s199 = int_to_ptr.vmem [resolvable:$true] %s198
          %204 = dma.hbm_to_vmem [thread:$0]  %s197, 768, %s199, %s186, 256, 256, 16
        $region28: #{tpu_custom_call.1} parent=19 // pred_fallthru
          _
      $region20: #{tpu_custom_call.1} parent=5 // pred_fallthru
        _
      %p205 = scmp.le.s32.totalorder 1, %s16
      %p206 = scmp.lt.s32.totalorder %s16, 7
      %p207 = pnand %p205, %p206
      %p208 = pneg %p207
      // Predicated region
      $region29: #{tpu_custom_call.1} parent=5 // pred_check
        _
      $region30: #{tpu_custom_call.1} parent=5 // pred_check_branch
        %210 = sbr.rel (%p207) target = $region32
      $region31: #{tpu_custom_call.1} parent=5 // pred_region
        %s211 = ssub.s32 %s16, 1
        // Predicated region
        $region33: #{tpu_custom_call.1} parent=31 // pred_check
          %p212 = pneg %p49
        $region34: #{tpu_custom_call.1} parent=31 // pred_check_branch
          %214 = sbr.rel (%p212) target = $region36
        $region35: #{tpu_custom_call.1} parent=31 // pred_region
          %215 = dma.done [#allocation4], 16
        $region36: #{tpu_custom_call.1} parent=31 // pred_fallthru
          _
        %s216 = sand.u32 %s64, 1
        %s217 = scalar_lea.sflag [#allocation3], %s216
        %s218 = sand.u32 %s64, 1
        %s219 = smul.addr %s218, 48
        %s220 = scalar_lea.vmem [#allocation5], %s219
        // Predicated region
        $region37: #{tpu_custom_call.1} parent=31 // pred_check
          %p221 = pneg %p77
        $region38: #{tpu_custom_call.1} parent=31 // pred_check_branch
          %223 = sbr.rel (%p221) target = $region40
        $region39: #{tpu_custom_call.1} parent=31 // pred_region
          %224 = dma.done %s217, 768
        $region40: #{tpu_custom_call.1} parent=31 // pred_fallthru
          _
        %s225 = sand.u32 %s92, 1
        %s226 = scalar_lea.sflag [#allocation7], %s225
        %s227 = sand.u32 %s92, 1
        %s228 = smul.addr %s227, 48
        %s229 = scalar_lea.vmem [#allocation6], %s228
        // Predicated region
        $region41: #{tpu_custom_call.1} parent=31 // pred_check
          %p230 = pneg %p105
        $region42: #{tpu_custom_call.1} parent=31 // pred_check_branch
          %232 = sbr.rel (%p230) target = $region44
        $region43: #{tpu_custom_call.1} parent=31 // pred_region
          %233 = dma.done %s226, 768
        $region44: #{tpu_custom_call.1} parent=31 // pred_fallthru
          _
        %234 = sfence
        %p235 = pneg %p49
        %p236 = pneg %p46
        %s237 = sand.u32 %s64, 1
        %s238 = scalar_lea.sflag [#allocation3], %s237
        %s239 = sand.u32 %s64, 1
        %s240 = smul.addr %s239, 48
        %s241 = scalar_lea.vmem [#allocation5], %s240
        %p242 = pneg %p77
        %p243 = pneg %p74
        %s244 = sand.u32 %s92, 1
        %s245 = scalar_lea.sflag [#allocation7], %s244
        %s246 = sand.u32 %s92, 1
        %s247 = smul.addr %s246, 48
        %s248 = scalar_lea.vmem [#allocation6], %s247
        %p249 = pneg %p105
        %p250 = pneg %p102
        %p251 = pneg %p131
        %p252 = pneg %p128
        %p253 = scmp.lt.s32.totalorder %s25, 5
        %s254 = scalar_select %p253, %s25, 5
        %s255 = scalar_lea.vmem %s3, %s254
        %p256 = scmp.lt.s32.totalorder %s25, 5
        %s257 = scalar_select %p256, %s25, 5
        %s258 = scalar_lea.vmem %s3, %s257
        %s259 = sld [smem:[#allocation2]]
        %s260 = sld [smem:[#allocation2 + $0x1]]
        %v261 = vld [vmem:[%s220] sm:$0xff]
        %v262 = vld [vmem:[%s220 + $0x8] sm:$0xff]
        %v263 = vld [vmem:[%s220 + $0x10] sm:$0xff]
        %v264 = vld [vmem:[%s220 + $0x18] sm:$0xff]
        %v265 = vld [vmem:[%s220 + $0x20] sm:$0xff]
        %v266 = vld [vmem:[%s220 + $0x28] sm:$0xff]
        %v267 = vld [vmem:[%s229] sm:$0xff]
        %v268 = vld [vmem:[%s229 + $0x8] sm:$0xff]
        %v269 = vld [vmem:[%s229 + $0x10] sm:$0xff]
        %v270 = vld [vmem:[%s229 + $0x18] sm:$0xff]
        %v271 = vld [vmem:[%s229 + $0x20] sm:$0xff]
        %v272 = vld [vmem:[%s229 + $0x28] sm:$0xff]
        %v273 = vmul.f32 %v261, 0.0010283801
        %v274 = vmul.f32 %v263, 0.0010283801
        %v275 = vmul.f32 %v265, 0.0010283801
        %v276 = vmul.f32 %v261, 0.007598758
        %v277 = vmul.f32 %v262, 0.007598758
        %v278 = vmul.f32 %v263, 0.007598758
        %v279 = vmul.f32 %v264, 0.007598758
        %v280 = vmul.f32 %v265, 0.007598758
        %v281 = vmul.f32 %v266, 0.007598758
        %288 = vrot.lane.b32.xlu0 %v276, 127
        %v289 = vpop.permute.xlu0 %288
        %290 = vrot.lane.b32.xlu0 %v277, 127
        %v291 = vpop.permute.xlu0 %290
        %292 = vrot.lane.b32.xlu0 %v278, 127
        %v293 = vpop.permute.xlu0 %292
        %294 = vrot.lane.b32.xlu0 %v279, 127
        %v295 = vpop.permute.xlu0 %294
        %296 = vrot.lane.b32.xlu0 %v280, 127
        %v297 = vpop.permute.xlu0 %296
        %298 = vrot.lane.b32.xlu0 %v281, 127
        %v299 = vpop.permute.xlu0 %298
        %vm300 = vcmask 1039360
        %v301 = vsel %vm300, %v289, %v291
        %v302 = vsel %vm300, %v293, %v295
        %v303 = vsel %vm300, %v297, %v299
        %v307 = vadd.f32 %v273, %v301
        %v308 = vadd.f32 %v274, %v302
        %v309 = vadd.f32 %v275, %v303
        %v310 = vmul.f32 %v261, 0.036000773
        %v311 = vmul.f32 %v262, 0.036000773
        %v312 = vmul.f32 %v263, 0.036000773
        %v313 = vmul.f32 %v264, 0.036000773
        %v314 = vmul.f32 %v265, 0.036000773
        %v315 = vmul.f32 %v266, 0.036000773
        %322 = vrot.lane.b32.xlu0 %v310, 126
        %v323 = vpop.permute.xlu0 %322
        %324 = vrot.lane.b32.xlu0 %v311, 126
        %v325 = vpop.permute.xlu0 %324
        %326 = vrot.lane.b32.xlu0 %v312, 126
        %v327 = vpop.permute.xlu0 %326
        %328 = vrot.lane.b32.xlu0 %v313, 126
        %v329 = vpop.permute.xlu0 %328
        %330 = vrot.lane.b32.xlu0 %v314, 126
        %v331 = vpop.permute.xlu0 %330
        %332 = vrot.lane.b32.xlu0 %v315, 126
        %v333 = vpop.permute.xlu0 %332
        %vm334 = vcmask 1031168
        %v335 = vsel %vm334, %v323, %v325
        %v336 = vsel %vm334, %v327, %v329
        %v337 = vsel %vm334, %v331, %v333
        %v341 = vadd.f32 %v307, %v335
        %v342 = vadd.f32 %v308, %v336
        %v343 = vadd.f32 %v309, %v337
        %v344 = vmul.f32 %v261, 0.10936069
        %v345 = vmul.f32 %v262, 0.10936069
        %v346 = vmul.f32 %v263, 0.10936069
        %v347 = vmul.f32 %v264, 0.10936069
        %v348 = vmul.f32 %v265, 0.10936069
        %v349 = vmul.f32 %v266, 0.10936069
        %356 = vrot.lane.b32.xlu0 %v344, 125
        %v357 = vpop.permute.xlu0 %356
        %358 = vrot.lane.b32.xlu0 %v345, 125
        %v359 = vpop.permute.xlu0 %358
        %360 = vrot.lane.b32.xlu0 %v346, 125
        %v361 = vpop.permute.xlu0 %360
        %362 = vrot.lane.b32.xlu0 %v347, 125
        %v363 = vpop.permute.xlu0 %362
        %364 = vrot.lane.b32.xlu0 %v348, 125
        %v365 = vpop.permute.xlu0 %364
        %366 = vrot.lane.b32.xlu0 %v349, 125
        %v367 = vpop.permute.xlu0 %366
        %vm368 = vcmask 1022976
        %v369 = vsel %vm368, %v357, %v359
        %v370 = vsel %vm368, %v361, %v363
        %v371 = vsel %vm368, %v365, %v367
        %v375 = vadd.f32 %v341, %v369
        %v376 = vadd.f32 %v342, %v370
        %v377 = vadd.f32 %v343, %v371
        %v378 = vmul.f32 %v261, 0.21300554
        %v379 = vmul.f32 %v262, 0.21300554
        %v380 = vmul.f32 %v263, 0.21300554
        %v381 = vmul.f32 %v264, 0.21300554
        %v382 = vmul.f32 %v265, 0.21300554
        %v383 = vmul.f32 %v266, 0.21300554
        %390 = vrot.lane.b32.xlu0 %v378, 124
        %v391 = vpop.permute.xlu0 %390
        %392 = vrot.lane.b32.xlu0 %v379, 124
        %v393 = vpop.permute.xlu0 %392
        %394 = vrot.lane.b32.xlu0 %v380, 124
        %v395 = vpop.permute.xlu0 %394
        %396 = vrot.lane.b32.xlu0 %v381, 124
        %v397 = vpop.permute.xlu0 %396
        %398 = vrot.lane.b32.xlu0 %v382, 124
        %v399 = vpop.permute.xlu0 %398
        %400 = vrot.lane.b32.xlu0 %v383, 124
        %v401 = vpop.permute.xlu0 %400
        %vm402 = vcmask 1014784
        %v403 = vsel %vm402, %v391, %v393
        %v404 = vsel %vm402, %v395, %v397
        %v405 = vsel %vm402, %v399, %v401
        %v409 = vadd.f32 %v375, %v403
        %v410 = vadd.f32 %v376, %v404
        %v411 = vadd.f32 %v377, %v405
        %v412 = vmul.f32 %v261, 0.26601171
        %v413 = vmul.f32 %v262, 0.26601171
        %v414 = vmul.f32 %v263, 0.26601171
        %v415 = vmul.f32 %v264, 0.26601171
        %v416 = vmul.f32 %v265, 0.26601171
        %v417 = vmul.f32 %v266, 0.26601171
        %424 = vrot.lane.b32.xlu0 %v412, 123
        %v425 = vpop.permute.xlu0 %424
        %426 = vrot.lane.b32.xlu0 %v413, 123
        %v427 = vpop.permute.xlu0 %426
        %428 = vrot.lane.b32.xlu0 %v414, 123
        %v429 = vpop.permute.xlu0 %428
        %430 = vrot.lane.b32.xlu0 %v415, 123
        %v431 = vpop.permute.xlu0 %430
        %432 = vrot.lane.b32.xlu0 %v416, 123
        %v433 = vpop.permute.xlu0 %432
        %434 = vrot.lane.b32.xlu0 %v417, 123
        %v435 = vpop.permute.xlu0 %434
        %vm436 = vcmask 1006592
        %v437 = vsel %vm436, %v425, %v427
        %v438 = vsel %vm436, %v429, %v431
        %v439 = vsel %vm436, %v433, %v435
        %v443 = vadd.f32 %v409, %v437
        %v444 = vadd.f32 %v410, %v438
        %v445 = vadd.f32 %v411, %v439
        %446 = vrot.lane.b32.xlu0 %v378, 122
        %v447 = vpop.permute.xlu0 %446
        %448 = vrot.lane.b32.xlu0 %v379, 122
        %v449 = vpop.permute.xlu0 %448
        %450 = vrot.lane.b32.xlu0 %v380, 122
        %v451 = vpop.permute.xlu0 %450
        %452 = vrot.lane.b32.xlu0 %v381, 122
        %v453 = vpop.permute.xlu0 %452
        %454 = vrot.lane.b32.xlu0 %v382, 122
        %v455 = vpop.permute.xlu0 %454
        %456 = vrot.lane.b32.xlu0 %v383, 122
        %v457 = vpop.permute.xlu0 %456
        %vm458 = vcmask 998400
        %v459 = vsel %vm458, %v447, %v449
        %v460 = vsel %vm458, %v451, %v453
        %v461 = vsel %vm458, %v455, %v457
        %v465 = vadd.f32 %v443, %v459
        %v466 = vadd.f32 %v444, %v460
        %v467 = vadd.f32 %v445, %v461
        %468 = vrot.lane.b32.xlu0 %v344, 121
        %v469 = vpop.permute.xlu0 %468
        %470 = vrot.lane.b32.xlu0 %v345, 121
        %v471 = vpop.permute.xlu0 %470
        %472 = vrot.lane.b32.xlu0 %v346, 121
        %v473 = vpop.permute.xlu0 %472
        %474 = vrot.lane.b32.xlu0 %v347, 121
        %v475 = vpop.permute.xlu0 %474
        %476 = vrot.lane.b32.xlu0 %v348, 121
        %v477 = vpop.permute.xlu0 %476
        %478 = vrot.lane.b32.xlu0 %v349, 121
        %v479 = vpop.permute.xlu0 %478
        %vm480 = vcmask 990208
        %v481 = vsel %vm480, %v469, %v471
        %v482 = vsel %vm480, %v473, %v475
        %v483 = vsel %vm480, %v477, %v479
        %v487 = vadd.f32 %v465, %v481
        %v488 = vadd.f32 %v466, %v482
        %v489 = vadd.f32 %v467, %v483
        %490 = vrot.lane.b32.xlu0 %v310, 120
        %v491 = vpop.permute.xlu0 %490
        %492 = vrot.lane.b32.xlu0 %v311, 120
        %v493 = vpop.permute.xlu0 %492
        %494 = vrot.lane.b32.xlu0 %v312, 120
        %v495 = vpop.permute.xlu0 %494
        %496 = vrot.lane.b32.xlu0 %v313, 120
        %v497 = vpop.permute.xlu0 %496
        %498 = vrot.lane.b32.xlu0 %v314, 120
        %v499 = vpop.permute.xlu0 %498
        %500 = vrot.lane.b32.xlu0 %v315, 120
        %v501 = vpop.permute.xlu0 %500
        %vm502 = vcmask 982016
        %v503 = vsel %vm502, %v491, %v493
        %v504 = vsel %vm502, %v495, %v497
        %v505 = vsel %vm502, %v499, %v501
        %v509 = vadd.f32 %v487, %v503
        %v510 = vadd.f32 %v488, %v504
        %v511 = vadd.f32 %v489, %v505
        %512 = vrot.lane.b32.xlu0 %v276, 119
        %v513 = vpop.permute.xlu0 %512
        %514 = vrot.lane.b32.xlu0 %v277, 119
        %v515 = vpop.permute.xlu0 %514
        %516 = vrot.lane.b32.xlu0 %v278, 119
        %v517 = vpop.permute.xlu0 %516
        %518 = vrot.lane.b32.xlu0 %v279, 119
        %v519 = vpop.permute.xlu0 %518
        %520 = vrot.lane.b32.xlu0 %v280, 119
        %v521 = vpop.permute.xlu0 %520
        %522 = vrot.lane.b32.xlu0 %v281, 119
        %v523 = vpop.permute.xlu0 %522
        %vm524 = vcmask 973824
        %v525 = vsel %vm524, %v513, %v515
        %v526 = vsel %vm524, %v517, %v519
        %v527 = vsel %vm524, %v521, %v523
        %v531 = vadd.f32 %v509, %v525
        %v532 = vadd.f32 %v510, %v526
        %v533 = vadd.f32 %v511, %v527
        %v534 = vmul.f32 %v262, 0.0010283801
        %v535 = vmul.f32 %v264, 0.0010283801
        %v536 = vmul.f32 %v266, 0.0010283801
        %543 = vrot.lane.b32.xlu0 %v273, 118
        %v544 = vpop.permute.xlu0 %543
        %545 = vrot.lane.b32.xlu0 %v534, 118
        %v546 = vpop.permute.xlu0 %545
        %547 = vrot.lane.b32.xlu0 %v274, 118
        %v548 = vpop.permute.xlu0 %547
        %549 = vrot.lane.b32.xlu0 %v535, 118
        %v550 = vpop.permute.xlu0 %549
        %551 = vrot.lane.b32.xlu0 %v275, 118
        %v552 = vpop.permute.xlu0 %551
        %553 = vrot.lane.b32.xlu0 %v536, 118
        %v554 = vpop.permute.xlu0 %553
        %vm555 = vcmask 965632
        %v556 = vsel %vm555, %v544, %v546
        %v557 = vsel %vm555, %v548, %v550
        %v558 = vsel %vm555, %v552, %v554
        %v562 = vadd.f32 %v531, %v556
        %v563 = vadd.f32 %v532, %v557
        %v564 = vadd.f32 %v533, %v558
        %v565 = vmul.f32 %v562, 0.0010283801
        %v566 = vmul.f32 %v562, 0.007598758
        %v567 = vmul.f32 %v563, 0.007598758
        %vm570 = vcmask 1046528
        %v571 = vrot.slane %v566, 1
        %v572 = vrot.slane %v567, 1
        %v573 = vsel %vm570, %v571, %v572
        %v575 = vadd.f32 %v565, %v573
        %v576 = vmul.f32 %v562, 0.036000773
        %v577 = vmul.f32 %v563, 0.036000773
        %vm580 = vcmask 1045504
        %v581 = vrot.slane %v576, 2
        %v582 = vrot.slane %v577, 2
        %v583 = vsel %vm580, %v581, %v582
        %v585 = vadd.f32 %v575, %v583
        %v586 = vmul.f32 %v562, 0.10936069
        %v587 = vmul.f32 %v563, 0.10936069
        %vm590 = vcmask 1044480
        %v591 = vrot.slane %v586, 3
        %v592 = vrot.slane %v587, 3
        %v593 = vsel %vm590, %v591, %v592
        %v595 = vadd.f32 %v585, %v593
        %v596 = vmul.f32 %v562, 0.21300554
        %v597 = vmul.f32 %v563, 0.21300554
        %vm600 = vcmask 1043456
        %v601 = vrot.slane %v596, 4
        %v602 = vrot.slane %v597, 4
        %v603 = vsel %vm600, %v601, %v602
        %v605 = vadd.f32 %v595, %v603
        %v606 = vmul.f32 %v562, 0.26601171
        %v607 = vmul.f32 %v563, 0.26601171
        %vm610 = vcmask 1042432
        %v611 = vrot.slane %v606, 5
        %v612 = vrot.slane %v607, 5
        %v613 = vsel %vm610, %v611, %v612
        %v615 = vadd.f32 %v605, %v613
        %vm616 = vcmask 1041408
        %v617 = vrot.slane %v596, 6
        %v618 = vrot.slane %v597, 6
        %v619 = vsel %vm616, %v617, %v618
        %v621 = vadd.f32 %v615, %v619
        %vm622 = vcmask 1040384
        %v623 = vrot.slane %v586, 7
        %v624 = vrot.slane %v587, 7
        %v625 = vsel %vm622, %v623, %v624
        %v627 = vadd.f32 %v621, %v625
        %v628 = vadd.f32 %v627, %v577
        %v629 = vmul.f32 %v564, 0.007598758
        %v631 = vrot.slane %v629, 1
        %v632 = vsel %vm570, %v572, %v631
        %v634 = vadd.f32 %v628, %v632
        %v635 = vmul.f32 %v563, 0.0010283801
        %v636 = vmul.f32 %v564, 0.0010283801
        %v639 = vrot.slane %v635, 2
        %v640 = vrot.slane %v636, 2
        %v641 = vsel %vm580, %v639, %v640
        %v643 = vadd.f32 %v634, %v641
        %v644 = vmul.f32 %v267, 0.0010283801
        %v645 = vmul.f32 %v269, 0.0010283801
        %v646 = vmul.f32 %v271, 0.0010283801
        %v647 = vmul.f32 %v267, 0.007598758
        %v648 = vmul.f32 %v268, 0.007598758
        %v649 = vmul.f32 %v269, 0.007598758
        %v650 = vmul.f32 %v270, 0.007598758
        %v651 = vmul.f32 %v271, 0.007598758
        %v652 = vmul.f32 %v272, 0.007598758
        %659 = vrot.lane.b32.xlu0 %v647, 127
        %v660 = vpop.permute.xlu0 %659
        %661 = vrot.lane.b32.xlu0 %v648, 127
        %v662 = vpop.permute.xlu0 %661
        %663 = vrot.lane.b32.xlu0 %v649, 127
        %v664 = vpop.permute.xlu0 %663
        %665 = vrot.lane.b32.xlu0 %v650, 127
        %v666 = vpop.permute.xlu0 %665
        %667 = vrot.lane.b32.xlu0 %v651, 127
        %v668 = vpop.permute.xlu0 %667
        %669 = vrot.lane.b32.xlu0 %v652, 127
        %v670 = vpop.permute.xlu0 %669
        %v671 = vsel %vm300, %v660, %v662
        %v672 = vsel %vm300, %v664, %v666
        %v673 = vsel %vm300, %v668, %v670
        %v677 = vadd.f32 %v644, %v671
        %v678 = vadd.f32 %v645, %v672
        %v679 = vadd.f32 %v646, %v673
        %v680 = vmul.f32 %v267, 0.036000773
        %v681 = vmul.f32 %v268, 0.036000773
        %v682 = vmul.f32 %v269, 0.036000773
        %v683 = vmul.f32 %v270, 0.036000773
        %v684 = vmul.f32 %v271, 0.036000773
        %v685 = vmul.f32 %v272, 0.036000773
        %692 = vrot.lane.b32.xlu0 %v680, 126
        %v693 = vpop.permute.xlu0 %692
        %694 = vrot.lane.b32.xlu0 %v681, 126
        %v695 = vpop.permute.xlu0 %694
        %696 = vrot.lane.b32.xlu0 %v682, 126
        %v697 = vpop.permute.xlu0 %696
        %698 = vrot.lane.b32.xlu0 %v683, 126
        %v699 = vpop.permute.xlu0 %698
        %700 = vrot.lane.b32.xlu0 %v684, 126
        %v701 = vpop.permute.xlu0 %700
        %702 = vrot.lane.b32.xlu0 %v685, 126
        %v703 = vpop.permute.xlu0 %702
        %v704 = vsel %vm334, %v693, %v695
        %v705 = vsel %vm334, %v697, %v699
        %v706 = vsel %vm334, %v701, %v703
        %v710 = vadd.f32 %v677, %v704
        %v711 = vadd.f32 %v678, %v705
        %v712 = vadd.f32 %v679, %v706
        %v713 = vmul.f32 %v267, 0.10936069
        %v714 = vmul.f32 %v268, 0.10936069
        %v715 = vmul.f32 %v269, 0.10936069
        %v716 = vmul.f32 %v270, 0.10936069
        %v717 = vmul.f32 %v271, 0.10936069
        %v718 = vmul.f32 %v272, 0.10936069
        %725 = vrot.lane.b32.xlu0 %v713, 125
        %v726 = vpop.permute.xlu0 %725
        %727 = vrot.lane.b32.xlu0 %v714, 125
        %v728 = vpop.permute.xlu0 %727
        %729 = vrot.lane.b32.xlu0 %v715, 125
        %v730 = vpop.permute.xlu0 %729
        %731 = vrot.lane.b32.xlu0 %v716, 125
        %v732 = vpop.permute.xlu0 %731
        %733 = vrot.lane.b32.xlu0 %v717, 125
        %v734 = vpop.permute.xlu0 %733
        %735 = vrot.lane.b32.xlu0 %v718, 125
        %v736 = vpop.permute.xlu0 %735
        %v737 = vsel %vm368, %v726, %v728
        %v738 = vsel %vm368, %v730, %v732
        %v739 = vsel %vm368, %v734, %v736
        %v743 = vadd.f32 %v710, %v737
        %v744 = vadd.f32 %v711, %v738
        %v745 = vadd.f32 %v712, %v739
        %v746 = vmul.f32 %v267, 0.21300554
        %v747 = vmul.f32 %v268, 0.21300554
        %v748 = vmul.f32 %v269, 0.21300554
        %v749 = vmul.f32 %v270, 0.21300554
        %v750 = vmul.f32 %v271, 0.21300554
        %v751 = vmul.f32 %v272, 0.21300554
        %758 = vrot.lane.b32.xlu0 %v746, 124
        %v759 = vpop.permute.xlu0 %758
        %760 = vrot.lane.b32.xlu0 %v747, 124
        %v761 = vpop.permute.xlu0 %760
        %762 = vrot.lane.b32.xlu0 %v748, 124
        %v763 = vpop.permute.xlu0 %762
        %764 = vrot.lane.b32.xlu0 %v749, 124
        %v765 = vpop.permute.xlu0 %764
        %766 = vrot.lane.b32.xlu0 %v750, 124
        %v767 = vpop.permute.xlu0 %766
        %768 = vrot.lane.b32.xlu0 %v751, 124
        %v769 = vpop.permute.xlu0 %768
        %v770 = vsel %vm402, %v759, %v761
        %v771 = vsel %vm402, %v763, %v765
        %v772 = vsel %vm402, %v767, %v769
        %v776 = vadd.f32 %v743, %v770
        %v777 = vadd.f32 %v744, %v771
        %v778 = vadd.f32 %v745, %v772
        %v779 = vmul.f32 %v267, 0.26601171
        %v780 = vmul.f32 %v268, 0.26601171
        %v781 = vmul.f32 %v269, 0.26601171
        %v782 = vmul.f32 %v270, 0.26601171
        %v783 = vmul.f32 %v271, 0.26601171
        %v784 = vmul.f32 %v272, 0.26601171
        %791 = vrot.lane.b32.xlu0 %v779, 123
        %v792 = vpop.permute.xlu0 %791
        %793 = vrot.lane.b32.xlu0 %v780, 123
        %v794 = vpop.permute.xlu0 %793
        %795 = vrot.lane.b32.xlu0 %v781, 123
        %v796 = vpop.permute.xlu0 %795
        %797 = vrot.lane.b32.xlu0 %v782, 123
        %v798 = vpop.permute.xlu0 %797
        %799 = vrot.lane.b32.xlu0 %v783, 123
        %v800 = vpop.permute.xlu0 %799
        %801 = vrot.lane.b32.xlu0 %v784, 123
        %v802 = vpop.permute.xlu0 %801
        %v803 = vsel %vm436, %v792, %v794
        %v804 = vsel %vm436, %v796, %v798
        %v805 = vsel %vm436, %v800, %v802
        %v809 = vadd.f32 %v776, %v803
        %v810 = vadd.f32 %v777, %v804
        %v811 = vadd.f32 %v778, %v805
        %812 = vrot.lane.b32.xlu0 %v746, 122
        %v813 = vpop.permute.xlu0 %812
        %814 = vrot.lane.b32.xlu0 %v747, 122
        %v815 = vpop.permute.xlu0 %814
        %816 = vrot.lane.b32.xlu0 %v748, 122
        %v817 = vpop.permute.xlu0 %816
        %818 = vrot.lane.b32.xlu0 %v749, 122
        %v819 = vpop.permute.xlu0 %818
        %820 = vrot.lane.b32.xlu0 %v750, 122
        %v821 = vpop.permute.xlu0 %820
        %822 = vrot.lane.b32.xlu0 %v751, 122
        %v823 = vpop.permute.xlu0 %822
        %v824 = vsel %vm458, %v813, %v815
        %v825 = vsel %vm458, %v817, %v819
        %v826 = vsel %vm458, %v821, %v823
        %v830 = vadd.f32 %v809, %v824
        %v831 = vadd.f32 %v810, %v825
        %v832 = vadd.f32 %v811, %v826
        %833 = vrot.lane.b32.xlu0 %v713, 121
        %v834 = vpop.permute.xlu0 %833
        %835 = vrot.lane.b32.xlu0 %v714, 121
        %v836 = vpop.permute.xlu0 %835
        %837 = vrot.lane.b32.xlu0 %v715, 121
        %v838 = vpop.permute.xlu0 %837
        %839 = vrot.lane.b32.xlu0 %v716, 121
        %v840 = vpop.permute.xlu0 %839
        %841 = vrot.lane.b32.xlu0 %v717, 121
        %v842 = vpop.permute.xlu0 %841
        %843 = vrot.lane.b32.xlu0 %v718, 121
        %v844 = vpop.permute.xlu0 %843
        %v845 = vsel %vm480, %v834, %v836
        %v846 = vsel %vm480, %v838, %v840
        %v847 = vsel %vm480, %v842, %v844
        %v851 = vadd.f32 %v830, %v845
        %v852 = vadd.f32 %v831, %v846
        %v853 = vadd.f32 %v832, %v847
        %854 = vrot.lane.b32.xlu0 %v680, 120
        %v855 = vpop.permute.xlu0 %854
        %856 = vrot.lane.b32.xlu0 %v681, 120
        %v857 = vpop.permute.xlu0 %856
        %858 = vrot.lane.b32.xlu0 %v682, 120
        %v859 = vpop.permute.xlu0 %858
        %860 = vrot.lane.b32.xlu0 %v683, 120
        %v861 = vpop.permute.xlu0 %860
        %862 = vrot.lane.b32.xlu0 %v684, 120
        %v863 = vpop.permute.xlu0 %862
        %864 = vrot.lane.b32.xlu0 %v685, 120
        %v865 = vpop.permute.xlu0 %864
        %v866 = vsel %vm502, %v855, %v857
        %v867 = vsel %vm502, %v859, %v861
        %v868 = vsel %vm502, %v863, %v865
        %v872 = vadd.f32 %v851, %v866
        %v873 = vadd.f32 %v852, %v867
        %v874 = vadd.f32 %v853, %v868
        %875 = vrot.lane.b32.xlu0 %v647, 119
        %v876 = vpop.permute.xlu0 %875
        %877 = vrot.lane.b32.xlu0 %v648, 119
        %v878 = vpop.permute.xlu0 %877
        %879 = vrot.lane.b32.xlu0 %v649, 119
        %v880 = vpop.permute.xlu0 %879
        %881 = vrot.lane.b32.xlu0 %v650, 119
        %v882 = vpop.permute.xlu0 %881
        %883 = vrot.lane.b32.xlu0 %v651, 119
        %v884 = vpop.permute.xlu0 %883
        %885 = vrot.lane.b32.xlu0 %v652, 119
        %v886 = vpop.permute.xlu0 %885
        %v887 = vsel %vm524, %v876, %v878
        %v888 = vsel %vm524, %v880, %v882
        %v889 = vsel %vm524, %v884, %v886
        %v893 = vadd.f32 %v872, %v887
        %v894 = vadd.f32 %v873, %v888
        %v895 = vadd.f32 %v874, %v889
        %v896 = vmul.f32 %v268, 0.0010283801
        %v897 = vmul.f32 %v270, 0.0010283801
        %v898 = vmul.f32 %v272, 0.0010283801
        %905 = vrot.lane.b32.xlu0 %v644, 118
        %v906 = vpop.permute.xlu0 %905
        %907 = vrot.lane.b32.xlu0 %v896, 118
        %v908 = vpop.permute.xlu0 %907
        %909 = vrot.lane.b32.xlu0 %v645, 118
        %v910 = vpop.permute.xlu0 %909
        %911 = vrot.lane.b32.xlu0 %v897, 118
        %v912 = vpop.permute.xlu0 %911
        %913 = vrot.lane.b32.xlu0 %v646, 118
        %v914 = vpop.permute.xlu0 %913
        %915 = vrot.lane.b32.xlu0 %v898, 118
        %v916 = vpop.permute.xlu0 %915
        %v917 = vsel %vm555, %v906, %v908
        %v918 = vsel %vm555, %v910, %v912
        %v919 = vsel %vm555, %v914, %v916
        %v923 = vadd.f32 %v893, %v917
        %v924 = vadd.f32 %v894, %v918
        %v925 = vadd.f32 %v895, %v919
        %v926 = vmul.f32 %v923, 0.0010283801
        %v927 = vmul.f32 %v923, 0.007598758
        %v928 = vmul.f32 %v924, 0.007598758
        %v931 = vrot.slane %v927, 1
        %v932 = vrot.slane %v928, 1
        %v933 = vsel %vm570, %v931, %v932
        %v935 = vadd.f32 %v926, %v933
        %v936 = vmul.f32 %v923, 0.036000773
        %v937 = vmul.f32 %v924, 0.036000773
        %v940 = vrot.slane %v936, 2
        %v941 = vrot.slane %v937, 2
        %v942 = vsel %vm580, %v940, %v941
        %v944 = vadd.f32 %v935, %v942
        %v945 = vmul.f32 %v923, 0.10936069
        %v946 = vmul.f32 %v924, 0.10936069
        %v949 = vrot.slane %v945, 3
        %v950 = vrot.slane %v946, 3
        %v951 = vsel %vm590, %v949, %v950
        %v953 = vadd.f32 %v944, %v951
        %v954 = vmul.f32 %v923, 0.21300554
        %v955 = vmul.f32 %v924, 0.21300554
        %v958 = vrot.slane %v954, 4
        %v959 = vrot.slane %v955, 4
        %v960 = vsel %vm600, %v958, %v959
        %v962 = vadd.f32 %v953, %v960
        %v963 = vmul.f32 %v923, 0.26601171
        %v964 = vmul.f32 %v924, 0.26601171
        %v967 = vrot.slane %v963, 5
        %v968 = vrot.slane %v964, 5
        %v969 = vsel %vm610, %v967, %v968
        %v971 = vadd.f32 %v962, %v969
        %v972 = vrot.slane %v954, 6
        %v973 = vrot.slane %v955, 6
        %v974 = vsel %vm616, %v972, %v973
        %v976 = vadd.f32 %v971, %v974
        %v977 = vrot.slane %v945, 7
        %v978 = vrot.slane %v946, 7
        %v979 = vsel %vm622, %v977, %v978
        %v981 = vadd.f32 %v976, %v979
        %v982 = vadd.f32 %v981, %v937
        %v983 = vmul.f32 %v925, 0.007598758
        %v985 = vrot.slane %v983, 1
        %v986 = vsel %vm570, %v932, %v985
        %v988 = vadd.f32 %v982, %v986
        %v989 = vmul.f32 %v924, 0.0010283801
        %v990 = vmul.f32 %v925, 0.0010283801
        %v993 = vrot.slane %v989, 2
        %v994 = vrot.slane %v990, 2
        %v995 = vsel %vm580, %v993, %v994
        %v997 = vadd.f32 %v988, %v995
        %v998 = vmul.f32 %v261, %v261
        %v999 = vmul.f32 %v262, %v262
        %v1000 = vmul.f32 %v263, %v263
        %v1001 = vmul.f32 %v264, %v264
        %v1002 = vmul.f32 %v265, %v265
        %v1003 = vmul.f32 %v266, %v266
        %v1004 = vmul.f32 %v998, 0.0010283801
        %v1005 = vmul.f32 %v1000, 0.0010283801
        %v1006 = vmul.f32 %v1002, 0.0010283801
        %v1007 = vmul.f32 %v998, 0.007598758
        %v1008 = vmul.f32 %v999, 0.007598758
        %v1009 = vmul.f32 %v1000, 0.007598758
        %v1010 = vmul.f32 %v1001, 0.007598758
        %v1011 = vmul.f32 %v1002, 0.007598758
        %v1012 = vmul.f32 %v1003, 0.007598758
        %1019 = vrot.lane.b32.xlu0 %v1007, 127
        %v1020 = vpop.permute.xlu0 %1019
        %1021 = vrot.lane.b32.xlu0 %v1008, 127
        %v1022 = vpop.permute.xlu0 %1021
        %1023 = vrot.lane.b32.xlu0 %v1009, 127
        %v1024 = vpop.permute.xlu0 %1023
        %1025 = vrot.lane.b32.xlu0 %v1010, 127
        %v1026 = vpop.permute.xlu0 %1025
        %1027 = vrot.lane.b32.xlu0 %v1011, 127
        %v1028 = vpop.permute.xlu0 %1027
        %1029 = vrot.lane.b32.xlu0 %v1012, 127
        %v1030 = vpop.permute.xlu0 %1029
        %v1031 = vsel %vm300, %v1020, %v1022
        %v1032 = vsel %vm300, %v1024, %v1026
        %v1033 = vsel %vm300, %v1028, %v1030
        %v1037 = vadd.f32 %v1004, %v1031
        %v1038 = vadd.f32 %v1005, %v1032
        %v1039 = vadd.f32 %v1006, %v1033
        %v1040 = vmul.f32 %v998, 0.036000773
        %v1041 = vmul.f32 %v999, 0.036000773
        %v1042 = vmul.f32 %v1000, 0.036000773
        %v1043 = vmul.f32 %v1001, 0.036000773
        %v1044 = vmul.f32 %v1002, 0.036000773
        %v1045 = vmul.f32 %v1003, 0.036000773
        %1052 = vrot.lane.b32.xlu0 %v1040, 126
        %v1053 = vpop.permute.xlu0 %1052
        %1054 = vrot.lane.b32.xlu0 %v1041, 126
        %v1055 = vpop.permute.xlu0 %1054
        %1056 = vrot.lane.b32.xlu0 %v1042, 126
        %v1057 = vpop.permute.xlu0 %1056
        %1058 = vrot.lane.b32.xlu0 %v1043, 126
        %v1059 = vpop.permute.xlu0 %1058
        %1060 = vrot.lane.b32.xlu0 %v1044, 126
        %v1061 = vpop.permute.xlu0 %1060
        %1062 = vrot.lane.b32.xlu0 %v1045, 126
        %v1063 = vpop.permute.xlu0 %1062
        %v1064 = vsel %vm334, %v1053, %v1055
        %v1065 = vsel %vm334, %v1057, %v1059
        %v1066 = vsel %vm334, %v1061, %v1063
        %v1070 = vadd.f32 %v1037, %v1064
        %v1071 = vadd.f32 %v1038, %v1065
        %v1072 = vadd.f32 %v1039, %v1066
        %v1073 = vmul.f32 %v998, 0.10936069
        %v1074 = vmul.f32 %v999, 0.10936069
        %v1075 = vmul.f32 %v1000, 0.10936069
        %v1076 = vmul.f32 %v1001, 0.10936069
        %v1077 = vmul.f32 %v1002, 0.10936069
        %v1078 = vmul.f32 %v1003, 0.10936069
        %1085 = vrot.lane.b32.xlu0 %v1073, 125
        %v1086 = vpop.permute.xlu0 %1085
        %1087 = vrot.lane.b32.xlu0 %v1074, 125
        %v1088 = vpop.permute.xlu0 %1087
        %1089 = vrot.lane.b32.xlu0 %v1075, 125
        %v1090 = vpop.permute.xlu0 %1089
        %1091 = vrot.lane.b32.xlu0 %v1076, 125
        %v1092 = vpop.permute.xlu0 %1091
        %1093 = vrot.lane.b32.xlu0 %v1077, 125
        %v1094 = vpop.permute.xlu0 %1093
        %1095 = vrot.lane.b32.xlu0 %v1078, 125
        %v1096 = vpop.permute.xlu0 %1095
        %v1097 = vsel %vm368, %v1086, %v1088
        %v1098 = vsel %vm368, %v1090, %v1092
        %v1099 = vsel %vm368, %v1094, %v1096
        %v1103 = vadd.f32 %v1070, %v1097
        %v1104 = vadd.f32 %v1071, %v1098
        %v1105 = vadd.f32 %v1072, %v1099
        %v1106 = vmul.f32 %v998, 0.21300554
        %v1107 = vmul.f32 %v999, 0.21300554
        %v1108 = vmul.f32 %v1000, 0.21300554
        %v1109 = vmul.f32 %v1001, 0.21300554
        %v1110 = vmul.f32 %v1002, 0.21300554
        %v1111 = vmul.f32 %v1003, 0.21300554
        %1118 = vrot.lane.b32.xlu0 %v1106, 124
        %v1119 = vpop.permute.xlu0 %1118
        %1120 = vrot.lane.b32.xlu0 %v1107, 124
        %v1121 = vpop.permute.xlu0 %1120
        %1122 = vrot.lane.b32.xlu0 %v1108, 124
        %v1123 = vpop.permute.xlu0 %1122
        %1124 = vrot.lane.b32.xlu0 %v1109, 124
        %v1125 = vpop.permute.xlu0 %1124
        %1126 = vrot.lane.b32.xlu0 %v1110, 124
        %v1127 = vpop.permute.xlu0 %1126
        %1128 = vrot.lane.b32.xlu0 %v1111, 124
        %v1129 = vpop.permute.xlu0 %1128
        %v1130 = vsel %vm402, %v1119, %v1121
        %v1131 = vsel %vm402, %v1123, %v1125
        %v1132 = vsel %vm402, %v1127, %v1129
        %v1136 = vadd.f32 %v1103, %v1130
        %v1137 = vadd.f32 %v1104, %v1131
        %v1138 = vadd.f32 %v1105, %v1132
        %v1139 = vmul.f32 %v998, 0.26601171
        %v1140 = vmul.f32 %v999, 0.26601171
        %v1141 = vmul.f32 %v1000, 0.26601171
        %v1142 = vmul.f32 %v1001, 0.26601171
        %v1143 = vmul.f32 %v1002, 0.26601171
        %v1144 = vmul.f32 %v1003, 0.26601171
        %1151 = vrot.lane.b32.xlu0 %v1139, 123
        %v1152 = vpop.permute.xlu0 %1151
        %1153 = vrot.lane.b32.xlu0 %v1140, 123
        %v1154 = vpop.permute.xlu0 %1153
        %1155 = vrot.lane.b32.xlu0 %v1141, 123
        %v1156 = vpop.permute.xlu0 %1155
        %1157 = vrot.lane.b32.xlu0 %v1142, 123
        %v1158 = vpop.permute.xlu0 %1157
        %1159 = vrot.lane.b32.xlu0 %v1143, 123
        %v1160 = vpop.permute.xlu0 %1159
        %1161 = vrot.lane.b32.xlu0 %v1144, 123
        %v1162 = vpop.permute.xlu0 %1161
        %v1163 = vsel %vm436, %v1152, %v1154
        %v1164 = vsel %vm436, %v1156, %v1158
        %v1165 = vsel %vm436, %v1160, %v1162
        %v1169 = vadd.f32 %v1136, %v1163
        %v1170 = vadd.f32 %v1137, %v1164
        %v1171 = vadd.f32 %v1138, %v1165
        %1172 = vrot.lane.b32.xlu0 %v1106, 122
        %v1173 = vpop.permute.xlu0 %1172
        %1174 = vrot.lane.b32.xlu0 %v1107, 122
        %v1175 = vpop.permute.xlu0 %1174
        %1176 = vrot.lane.b32.xlu0 %v1108, 122
        %v1177 = vpop.permute.xlu0 %1176
        %1178 = vrot.lane.b32.xlu0 %v1109, 122
        %v1179 = vpop.permute.xlu0 %1178
        %1180 = vrot.lane.b32.xlu0 %v1110, 122
        %v1181 = vpop.permute.xlu0 %1180
        %1182 = vrot.lane.b32.xlu0 %v1111, 122
        %v1183 = vpop.permute.xlu0 %1182
        %v1184 = vsel %vm458, %v1173, %v1175
        %v1185 = vsel %vm458, %v1177, %v1179
        %v1186 = vsel %vm458, %v1181, %v1183
        %v1190 = vadd.f32 %v1169, %v1184
        %v1191 = vadd.f32 %v1170, %v1185
        %v1192 = vadd.f32 %v1171, %v1186
        %1193 = vrot.lane.b32.xlu0 %v1073, 121
        %v1194 = vpop.permute.xlu0 %1193
        %1195 = vrot.lane.b32.xlu0 %v1074, 121
        %v1196 = vpop.permute.xlu0 %1195
        %1197 = vrot.lane.b32.xlu0 %v1075, 121
        %v1198 = vpop.permute.xlu0 %1197
        %1199 = vrot.lane.b32.xlu0 %v1076, 121
        %v1200 = vpop.permute.xlu0 %1199
        %1201 = vrot.lane.b32.xlu0 %v1077, 121
        %v1202 = vpop.permute.xlu0 %1201
        %1203 = vrot.lane.b32.xlu0 %v1078, 121
        %v1204 = vpop.permute.xlu0 %1203
        %v1205 = vsel %vm480, %v1194, %v1196
        %v1206 = vsel %vm480, %v1198, %v1200
        %v1207 = vsel %vm480, %v1202, %v1204
        %v1211 = vadd.f32 %v1190, %v1205
        %v1212 = vadd.f32 %v1191, %v1206
        %v1213 = vadd.f32 %v1192, %v1207
        %1214 = vrot.lane.b32.xlu0 %v1040, 120
        %v1215 = vpop.permute.xlu0 %1214
        %1216 = vrot.lane.b32.xlu0 %v1041, 120
        %v1217 = vpop.permute.xlu0 %1216
        %1218 = vrot.lane.b32.xlu0 %v1042, 120
        %v1219 = vpop.permute.xlu0 %1218
        %1220 = vrot.lane.b32.xlu0 %v1043, 120
        %v1221 = vpop.permute.xlu0 %1220
        %1222 = vrot.lane.b32.xlu0 %v1044, 120
        %v1223 = vpop.permute.xlu0 %1222
        %1224 = vrot.lane.b32.xlu0 %v1045, 120
        %v1225 = vpop.permute.xlu0 %1224
        %v1226 = vsel %vm502, %v1215, %v1217
        %v1227 = vsel %vm502, %v1219, %v1221
        %v1228 = vsel %vm502, %v1223, %v1225
        %v1232 = vadd.f32 %v1211, %v1226
        %v1233 = vadd.f32 %v1212, %v1227
        %v1234 = vadd.f32 %v1213, %v1228
        %1235 = vrot.lane.b32.xlu0 %v1007, 119
        %v1236 = vpop.permute.xlu0 %1235
        %1237 = vrot.lane.b32.xlu0 %v1008, 119
        %v1238 = vpop.permute.xlu0 %1237
        %1239 = vrot.lane.b32.xlu0 %v1009, 119
        %v1240 = vpop.permute.xlu0 %1239
        %1241 = vrot.lane.b32.xlu0 %v1010, 119
        %v1242 = vpop.permute.xlu0 %1241
        %1243 = vrot.lane.b32.xlu0 %v1011, 119
        %v1244 = vpop.permute.xlu0 %1243
        %1245 = vrot.lane.b32.xlu0 %v1012, 119
        %v1246 = vpop.permute.xlu0 %1245
        %v1247 = vsel %vm524, %v1236, %v1238
        %v1248 = vsel %vm524, %v1240, %v1242
        %v1249 = vsel %vm524, %v1244, %v1246
        %v1253 = vadd.f32 %v1232, %v1247
        %v1254 = vadd.f32 %v1233, %v1248
        %v1255 = vadd.f32 %v1234, %v1249
        %v1256 = vmul.f32 %v999, 0.0010283801
        %v1257 = vmul.f32 %v1001, 0.0010283801
        %v1258 = vmul.f32 %v1003, 0.0010283801
        %1265 = vrot.lane.b32.xlu0 %v1004, 118
        %v1266 = vpop.permute.xlu0 %1265
        %1267 = vrot.lane.b32.xlu0 %v1256, 118
        %v1268 = vpop.permute.xlu0 %1267
        %1269 = vrot.lane.b32.xlu0 %v1005, 118
        %v1270 = vpop.permute.xlu0 %1269
        %1271 = vrot.lane.b32.xlu0 %v1257, 118
        %v1272 = vpop.permute.xlu0 %1271
        %1273 = vrot.lane.b32.xlu0 %v1006, 118
        %v1274 = vpop.permute.xlu0 %1273
        %1275 = vrot.lane.b32.xlu0 %v1258, 118
        %v1276 = vpop.permute.xlu0 %1275
        %v1277 = vsel %vm555, %v1266, %v1268
        %v1278 = vsel %vm555, %v1270, %v1272
        %v1279 = vsel %vm555, %v1274, %v1276
        %v1283 = vadd.f32 %v1253, %v1277
        %v1284 = vadd.f32 %v1254, %v1278
        %v1285 = vadd.f32 %v1255, %v1279
        %v1286 = vmul.f32 %v1283, 0.0010283801
        %v1287 = vmul.f32 %v1283, 0.007598758
        %v1288 = vmul.f32 %v1284, 0.007598758
        %v1291 = vrot.slane %v1287, 1
        %v1292 = vrot.slane %v1288, 1
        %v1293 = vsel %vm570, %v1291, %v1292
        %v1295 = vadd.f32 %v1286, %v1293
        %v1296 = vmul.f32 %v1283, 0.036000773
        %v1297 = vmul.f32 %v1284, 0.036000773
        %v1300 = vrot.slane %v1296, 2
        %v1301 = vrot.slane %v1297, 2
        %v1302 = vsel %vm580, %v1300, %v1301
        %v1304 = vadd.f32 %v1295, %v1302
        %v1305 = vmul.f32 %v1283, 0.10936069
        %v1306 = vmul.f32 %v1284, 0.10936069
        %v1309 = vrot.slane %v1305, 3
        %v1310 = vrot.slane %v1306, 3
        %v1311 = vsel %vm590, %v1309, %v1310
        %v1313 = vadd.f32 %v1304, %v1311
        %v1314 = vmul.f32 %v1283, 0.21300554
        %v1315 = vmul.f32 %v1284, 0.21300554
        %v1318 = vrot.slane %v1314, 4
        %v1319 = vrot.slane %v1315, 4
        %v1320 = vsel %vm600, %v1318, %v1319
        %v1322 = vadd.f32 %v1313, %v1320
        %v1323 = vmul.f32 %v1283, 0.26601171
        %v1324 = vmul.f32 %v1284, 0.26601171
        %v1327 = vrot.slane %v1323, 5
        %v1328 = vrot.slane %v1324, 5
        %v1329 = vsel %vm610, %v1327, %v1328
        %v1331 = vadd.f32 %v1322, %v1329
        %v1332 = vrot.slane %v1314, 6
        %v1333 = vrot.slane %v1315, 6
        %v1334 = vsel %vm616, %v1332, %v1333
        %v1336 = vadd.f32 %v1331, %v1334
        %v1337 = vrot.slane %v1305, 7
        %v1338 = vrot.slane %v1306, 7
        %v1339 = vsel %vm622, %v1337, %v1338
        %v1341 = vadd.f32 %v1336, %v1339
        %v1342 = vadd.f32 %v1341, %v1297
        %v1343 = vmul.f32 %v1285, 0.007598758
        %v1345 = vrot.slane %v1343, 1
        %v1346 = vsel %vm570, %v1292, %v1345
        %v1348 = vadd.f32 %v1342, %v1346
        %v1349 = vmul.f32 %v1284, 0.0010283801
        %v1350 = vmul.f32 %v1285, 0.0010283801
        %v1353 = vrot.slane %v1349, 2
        %v1354 = vrot.slane %v1350, 2
        %v1355 = vsel %vm580, %v1353, %v1354
        %v1357 = vadd.f32 %v1348, %v1355
        %v1358 = vmul.f32 %v267, %v267
        %v1359 = vmul.f32 %v268, %v268
        %v1360 = vmul.f32 %v269, %v269
        %v1361 = vmul.f32 %v270, %v270
        %v1362 = vmul.f32 %v271, %v271
        %v1363 = vmul.f32 %v272, %v272
        %v1364 = vmul.f32 %v1358, 0.0010283801
        %v1365 = vmul.f32 %v1360, 0.0010283801
        %v1366 = vmul.f32 %v1362, 0.0010283801
        %v1367 = vmul.f32 %v1358, 0.007598758
        %v1368 = vmul.f32 %v1359, 0.007598758
        %v1369 = vmul.f32 %v1360, 0.007598758
        %v1370 = vmul.f32 %v1361, 0.007598758
        %v1371 = vmul.f32 %v1362, 0.007598758
        %v1372 = vmul.f32 %v1363, 0.007598758
        %1379 = vrot.lane.b32.xlu0 %v1367, 127
        %v1380 = vpop.permute.xlu0 %1379
        %1381 = vrot.lane.b32.xlu0 %v1368, 127
        %v1382 = vpop.permute.xlu0 %1381
        %1383 = vrot.lane.b32.xlu0 %v1369, 127
        %v1384 = vpop.permute.xlu0 %1383
        %1385 = vrot.lane.b32.xlu0 %v1370, 127
        %v1386 = vpop.permute.xlu0 %1385
        %1387 = vrot.lane.b32.xlu0 %v1371, 127
        %v1388 = vpop.permute.xlu0 %1387
        %1389 = vrot.lane.b32.xlu0 %v1372, 127
        %v1390 = vpop.permute.xlu0 %1389
        %v1391 = vsel %vm300, %v1380, %v1382
        %v1392 = vsel %vm300, %v1384, %v1386
        %v1393 = vsel %vm300, %v1388, %v1390
        %v1397 = vadd.f32 %v1364, %v1391
        %v1398 = vadd.f32 %v1365, %v1392
        %v1399 = vadd.f32 %v1366, %v1393
        %v1400 = vmul.f32 %v1358, 0.036000773
        %v1401 = vmul.f32 %v1359, 0.036000773
        %v1402 = vmul.f32 %v1360, 0.036000773
        %v1403 = vmul.f32 %v1361, 0.036000773
        %v1404 = vmul.f32 %v1362, 0.036000773
        %v1405 = vmul.f32 %v1363, 0.036000773
        %1412 = vrot.lane.b32.xlu0 %v1400, 126
        %v1413 = vpop.permute.xlu0 %1412
        %1414 = vrot.lane.b32.xlu0 %v1401, 126
        %v1415 = vpop.permute.xlu0 %1414
        %1416 = vrot.lane.b32.xlu0 %v1402, 126
        %v1417 = vpop.permute.xlu0 %1416
        %1418 = vrot.lane.b32.xlu0 %v1403, 126
        %v1419 = vpop.permute.xlu0 %1418
        %1420 = vrot.lane.b32.xlu0 %v1404, 126
        %v1421 = vpop.permute.xlu0 %1420
        %1422 = vrot.lane.b32.xlu0 %v1405, 126
        %v1423 = vpop.permute.xlu0 %1422
        %v1424 = vsel %vm334, %v1413, %v1415
        %v1425 = vsel %vm334, %v1417, %v1419
        %v1426 = vsel %vm334, %v1421, %v1423
        %v1430 = vadd.f32 %v1397, %v1424
        %v1431 = vadd.f32 %v1398, %v1425
        %v1432 = vadd.f32 %v1399, %v1426
        %v1433 = vmul.f32 %v1358, 0.10936069
        %v1434 = vmul.f32 %v1359, 0.10936069
        %v1435 = vmul.f32 %v1360, 0.10936069
        %v1436 = vmul.f32 %v1361, 0.10936069
        %v1437 = vmul.f32 %v1362, 0.10936069
        %v1438 = vmul.f32 %v1363, 0.10936069
        %1445 = vrot.lane.b32.xlu0 %v1433, 125
        %v1446 = vpop.permute.xlu0 %1445
        %1447 = vrot.lane.b32.xlu0 %v1434, 125
        %v1448 = vpop.permute.xlu0 %1447
        %1449 = vrot.lane.b32.xlu0 %v1435, 125
        %v1450 = vpop.permute.xlu0 %1449
        %1451 = vrot.lane.b32.xlu0 %v1436, 125
        %v1452 = vpop.permute.xlu0 %1451
        %1453 = vrot.lane.b32.xlu0 %v1437, 125
        %v1454 = vpop.permute.xlu0 %1453
        %1455 = vrot.lane.b32.xlu0 %v1438, 125
        %v1456 = vpop.permute.xlu0 %1455
        %v1457 = vsel %vm368, %v1446, %v1448
        %v1458 = vsel %vm368, %v1450, %v1452
        %v1459 = vsel %vm368, %v1454, %v1456
        %v1463 = vadd.f32 %v1430, %v1457
        %v1464 = vadd.f32 %v1431, %v1458
        %v1465 = vadd.f32 %v1432, %v1459
        %v1466 = vmul.f32 %v1358, 0.21300554
        %v1467 = vmul.f32 %v1359, 0.21300554
        %v1468 = vmul.f32 %v1360, 0.21300554
        %v1469 = vmul.f32 %v1361, 0.21300554
        %v1470 = vmul.f32 %v1362, 0.21300554
        %v1471 = vmul.f32 %v1363, 0.21300554
        %1478 = vrot.lane.b32.xlu0 %v1466, 124
        %v1479 = vpop.permute.xlu0 %1478
        %1480 = vrot.lane.b32.xlu0 %v1467, 124
        %v1481 = vpop.permute.xlu0 %1480
        %1482 = vrot.lane.b32.xlu0 %v1468, 124
        %v1483 = vpop.permute.xlu0 %1482
        %1484 = vrot.lane.b32.xlu0 %v1469, 124
        %v1485 = vpop.permute.xlu0 %1484
        %1486 = vrot.lane.b32.xlu0 %v1470, 124
        %v1487 = vpop.permute.xlu0 %1486
        %1488 = vrot.lane.b32.xlu0 %v1471, 124
        %v1489 = vpop.permute.xlu0 %1488
        %v1490 = vsel %vm402, %v1479, %v1481
        %v1491 = vsel %vm402, %v1483, %v1485
        %v1492 = vsel %vm402, %v1487, %v1489
        %v1496 = vadd.f32 %v1463, %v1490
        %v1497 = vadd.f32 %v1464, %v1491
        %v1498 = vadd.f32 %v1465, %v1492
        %v1499 = vmul.f32 %v1358, 0.26601171
        %v1500 = vmul.f32 %v1359, 0.26601171
        %v1501 = vmul.f32 %v1360, 0.26601171
        %v1502 = vmul.f32 %v1361, 0.26601171
        %v1503 = vmul.f32 %v1362, 0.26601171
        %v1504 = vmul.f32 %v1363, 0.26601171
        %1511 = vrot.lane.b32.xlu0 %v1499, 123
        %v1512 = vpop.permute.xlu0 %1511
        %1513 = vrot.lane.b32.xlu0 %v1500, 123
        %v1514 = vpop.permute.xlu0 %1513
        %1515 = vrot.lane.b32.xlu0 %v1501, 123
        %v1516 = vpop.permute.xlu0 %1515
        %1517 = vrot.lane.b32.xlu0 %v1502, 123
        %v1518 = vpop.permute.xlu0 %1517
        %1519 = vrot.lane.b32.xlu0 %v1503, 123
        %v1520 = vpop.permute.xlu0 %1519
        %1521 = vrot.lane.b32.xlu0 %v1504, 123
        %v1522 = vpop.permute.xlu0 %1521
        %v1523 = vsel %vm436, %v1512, %v1514
        %v1524 = vsel %vm436, %v1516, %v1518
        %v1525 = vsel %vm436, %v1520, %v1522
        %v1529 = vadd.f32 %v1496, %v1523
        %v1530 = vadd.f32 %v1497, %v1524
        %v1531 = vadd.f32 %v1498, %v1525
        %1532 = vrot.lane.b32.xlu0 %v1466, 122
        %v1533 = vpop.permute.xlu0 %1532
        %1534 = vrot.lane.b32.xlu0 %v1467, 122
        %v1535 = vpop.permute.xlu0 %1534
        %1536 = vrot.lane.b32.xlu0 %v1468, 122
        %v1537 = vpop.permute.xlu0 %1536
        %1538 = vrot.lane.b32.xlu0 %v1469, 122
        %v1539 = vpop.permute.xlu0 %1538
        %1540 = vrot.lane.b32.xlu0 %v1470, 122
        %v1541 = vpop.permute.xlu0 %1540
        %1542 = vrot.lane.b32.xlu0 %v1471, 122
        %v1543 = vpop.permute.xlu0 %1542
        %v1544 = vsel %vm458, %v1533, %v1535
        %v1545 = vsel %vm458, %v1537, %v1539
        %v1546 = vsel %vm458, %v1541, %v1543
        %v1550 = vadd.f32 %v1529, %v1544
        %v1551 = vadd.f32 %v1530, %v1545
        %v1552 = vadd.f32 %v1531, %v1546
        %1553 = vrot.lane.b32.xlu0 %v1433, 121
        %v1554 = vpop.permute.xlu0 %1553
        %1555 = vrot.lane.b32.xlu0 %v1434, 121
        %v1556 = vpop.permute.xlu0 %1555
        %1557 = vrot.lane.b32.xlu0 %v1435, 121
        %v1558 = vpop.permute.xlu0 %1557
        %1559 = vrot.lane.b32.xlu0 %v1436, 121
        %v1560 = vpop.permute.xlu0 %1559
        %1561 = vrot.lane.b32.xlu0 %v1437, 121
        %v1562 = vpop.permute.xlu0 %1561
        %1563 = vrot.lane.b32.xlu0 %v1438, 121
        %v1564 = vpop.permute.xlu0 %1563
        %v1565 = vsel %vm480, %v1554, %v1556
        %v1566 = vsel %vm480, %v1558, %v1560
        %v1567 = vsel %vm480, %v1562, %v1564
        %v1571 = vadd.f32 %v1550, %v1565
        %v1572 = vadd.f32 %v1551, %v1566
        %v1573 = vadd.f32 %v1552, %v1567
        %1574 = vrot.lane.b32.xlu0 %v1400, 120
        %v1575 = vpop.permute.xlu0 %1574
        %1576 = vrot.lane.b32.xlu0 %v1401, 120
        %v1577 = vpop.permute.xlu0 %1576
        %1578 = vrot.lane.b32.xlu0 %v1402, 120
        %v1579 = vpop.permute.xlu0 %1578
        %1580 = vrot.lane.b32.xlu0 %v1403, 120
        %v1581 = vpop.permute.xlu0 %1580
        %1582 = vrot.lane.b32.xlu0 %v1404, 120
        %v1583 = vpop.permute.xlu0 %1582
        %1584 = vrot.lane.b32.xlu0 %v1405, 120
        %v1585 = vpop.permute.xlu0 %1584
        %v1586 = vsel %vm502, %v1575, %v1577
        %v1587 = vsel %vm502, %v1579, %v1581
        %v1588 = vsel %vm502, %v1583, %v1585
        %v1592 = vadd.f32 %v1571, %v1586
        %v1593 = vadd.f32 %v1572, %v1587
        %v1594 = vadd.f32 %v1573, %v1588
        %1595 = vrot.lane.b32.xlu0 %v1367, 119
        %v1596 = vpop.permute.xlu0 %1595
        %1597 = vrot.lane.b32.xlu0 %v1368, 119
        %v1598 = vpop.permute.xlu0 %1597
        %1599 = vrot.lane.b32.xlu0 %v1369, 119
        %v1600 = vpop.permute.xlu0 %1599
        %1601 = vrot.lane.b32.xlu0 %v1370, 119
        %v1602 = vpop.permute.xlu0 %1601
        %1603 = vrot.lane.b32.xlu0 %v1371, 119
        %v1604 = vpop.permute.xlu0 %1603
        %1605 = vrot.lane.b32.xlu0 %v1372, 119
        %v1606 = vpop.permute.xlu0 %1605
        %v1607 = vsel %vm524, %v1596, %v1598
        %v1608 = vsel %vm524, %v1600, %v1602
        %v1609 = vsel %vm524, %v1604, %v1606
        %v1613 = vadd.f32 %v1592, %v1607
        %v1614 = vadd.f32 %v1593, %v1608
        %v1615 = vadd.f32 %v1594, %v1609
        %v1616 = vmul.f32 %v1359, 0.0010283801
        %v1617 = vmul.f32 %v1361, 0.0010283801
        %v1618 = vmul.f32 %v1363, 0.0010283801
        %1625 = vrot.lane.b32.xlu0 %v1364, 118
        %v1626 = vpop.permute.xlu0 %1625
        %1627 = vrot.lane.b32.xlu0 %v1616, 118
        %v1628 = vpop.permute.xlu0 %1627
        %1629 = vrot.lane.b32.xlu0 %v1365, 118
        %v1630 = vpop.permute.xlu0 %1629
        %1631 = vrot.lane.b32.xlu0 %v1617, 118
        %v1632 = vpop.permute.xlu0 %1631
        %1633 = vrot.lane.b32.xlu0 %v1366, 118
        %v1634 = vpop.permute.xlu0 %1633
        %1635 = vrot.lane.b32.xlu0 %v1618, 118
        %v1636 = vpop.permute.xlu0 %1635
        %v1637 = vsel %vm555, %v1626, %v1628
        %v1638 = vsel %vm555, %v1630, %v1632
        %v1639 = vsel %vm555, %v1634, %v1636
        %v1643 = vadd.f32 %v1613, %v1637
        %v1644 = vadd.f32 %v1614, %v1638
        %v1645 = vadd.f32 %v1615, %v1639
        %v1646 = vmul.f32 %v1643, 0.0010283801
        %v1647 = vmul.f32 %v1643, 0.007598758
        %v1648 = vmul.f32 %v1644, 0.007598758
        %v1651 = vrot.slane %v1647, 1
        %v1652 = vrot.slane %v1648, 1
        %v1653 = vsel %vm570, %v1651, %v1652
        %v1655 = vadd.f32 %v1646, %v1653
        %v1656 = vmul.f32 %v1643, 0.036000773
        %v1657 = vmul.f32 %v1644, 0.036000773
        %v1660 = vrot.slane %v1656, 2
        %v1661 = vrot.slane %v1657, 2
        %v1662 = vsel %vm580, %v1660, %v1661
        %v1664 = vadd.f32 %v1655, %v1662
        %v1665 = vmul.f32 %v1643, 0.10936069
        %v1666 = vmul.f32 %v1644, 0.10936069
        %v1669 = vrot.slane %v1665, 3
        %v1670 = vrot.slane %v1666, 3
        %v1671 = vsel %vm590, %v1669, %v1670
        %v1673 = vadd.f32 %v1664, %v1671
        %v1674 = vmul.f32 %v1643, 0.21300554
        %v1675 = vmul.f32 %v1644, 0.21300554
        %v1678 = vrot.slane %v1674, 4
        %v1679 = vrot.slane %v1675, 4
        %v1680 = vsel %vm600, %v1678, %v1679
        %v1682 = vadd.f32 %v1673, %v1680
        %v1683 = vmul.f32 %v1643, 0.26601171
        %v1684 = vmul.f32 %v1644, 0.26601171
        %v1687 = vrot.slane %v1683, 5
        %v1688 = vrot.slane %v1684, 5
        %v1689 = vsel %vm610, %v1687, %v1688
        %v1691 = vadd.f32 %v1682, %v1689
        %v1692 = vrot.slane %v1674, 6
        %v1693 = vrot.slane %v1675, 6
        %v1694 = vsel %vm616, %v1692, %v1693
        %v1696 = vadd.f32 %v1691, %v1694
        %v1697 = vrot.slane %v1665, 7
        %v1698 = vrot.slane %v1666, 7
        %v1699 = vsel %vm622, %v1697, %v1698
        %v1701 = vadd.f32 %v1696, %v1699
        %v1702 = vadd.f32 %v1701, %v1657
        %v1703 = vmul.f32 %v1645, 0.007598758
        %v1705 = vrot.slane %v1703, 1
        %v1706 = vsel %vm570, %v1652, %v1705
        %v1708 = vadd.f32 %v1702, %v1706
        %v1709 = vmul.f32 %v1644, 0.0010283801
        %v1710 = vmul.f32 %v1645, 0.0010283801
        %v1713 = vrot.slane %v1709, 2
        %v1714 = vrot.slane %v1710, 2
        %v1715 = vsel %vm580, %v1713, %v1714
        %v1717 = vadd.f32 %v1708, %v1715
        %v1718 = vmul.f32 %v261, %v267
        %v1719 = vmul.f32 %v262, %v268
        %v1720 = vmul.f32 %v263, %v269
        %v1721 = vmul.f32 %v264, %v270
        %v1722 = vmul.f32 %v265, %v271
        %v1723 = vmul.f32 %v266, %v272
        %v1724 = vmul.f32 %v1718, 0.0010283801
        %v1725 = vmul.f32 %v1720, 0.0010283801
        %v1726 = vmul.f32 %v1722, 0.0010283801
        %v1727 = vmul.f32 %v1718, 0.007598758
        %v1728 = vmul.f32 %v1719, 0.007598758
        %v1729 = vmul.f32 %v1720, 0.007598758
        %v1730 = vmul.f32 %v1721, 0.007598758
        %v1731 = vmul.f32 %v1722, 0.007598758
        %v1732 = vmul.f32 %v1723, 0.007598758
        %1739 = vrot.lane.b32.xlu0 %v1727, 127
        %v1740 = vpop.permute.xlu0 %1739
        %1741 = vrot.lane.b32.xlu0 %v1728, 127
        %v1742 = vpop.permute.xlu0 %1741
        %1743 = vrot.lane.b32.xlu0 %v1729, 127
        %v1744 = vpop.permute.xlu0 %1743
        %1745 = vrot.lane.b32.xlu0 %v1730, 127
        %v1746 = vpop.permute.xlu0 %1745
        %1747 = vrot.lane.b32.xlu0 %v1731, 127
        %v1748 = vpop.permute.xlu0 %1747
        %1749 = vrot.lane.b32.xlu0 %v1732, 127
        %v1750 = vpop.permute.xlu0 %1749
        %v1751 = vsel %vm300, %v1740, %v1742
        %v1752 = vsel %vm300, %v1744, %v1746
        %v1753 = vsel %vm300, %v1748, %v1750
        %v1757 = vadd.f32 %v1724, %v1751
        %v1758 = vadd.f32 %v1725, %v1752
        %v1759 = vadd.f32 %v1726, %v1753
        %v1760 = vmul.f32 %v1718, 0.036000773
        %v1761 = vmul.f32 %v1719, 0.036000773
        %v1762 = vmul.f32 %v1720, 0.036000773
        %v1763 = vmul.f32 %v1721, 0.036000773
        %v1764 = vmul.f32 %v1722, 0.036000773
        %v1765 = vmul.f32 %v1723, 0.036000773
        %1772 = vrot.lane.b32.xlu0 %v1760, 126
        %v1773 = vpop.permute.xlu0 %1772
        %1774 = vrot.lane.b32.xlu0 %v1761, 126
        %v1775 = vpop.permute.xlu0 %1774
        %1776 = vrot.lane.b32.xlu0 %v1762, 126
        %v1777 = vpop.permute.xlu0 %1776
        %1778 = vrot.lane.b32.xlu0 %v1763, 126
        %v1779 = vpop.permute.xlu0 %1778
        %1780 = vrot.lane.b32.xlu0 %v1764, 126
        %v1781 = vpop.permute.xlu0 %1780
        %1782 = vrot.lane.b32.xlu0 %v1765, 126
        %v1783 = vpop.permute.xlu0 %1782
        %v1784 = vsel %vm334, %v1773, %v1775
        %v1785 = vsel %vm334, %v1777, %v1779
        %v1786 = vsel %vm334, %v1781, %v1783
        %v1790 = vadd.f32 %v1757, %v1784
        %v1791 = vadd.f32 %v1758, %v1785
        %v1792 = vadd.f32 %v1759, %v1786
        %v1793 = vmul.f32 %v1718, 0.10936069
        %v1794 = vmul.f32 %v1719, 0.10936069
        %v1795 = vmul.f32 %v1720, 0.10936069
        %v1796 = vmul.f32 %v1721, 0.10936069
        %v1797 = vmul.f32 %v1722, 0.10936069
        %v1798 = vmul.f32 %v1723, 0.10936069
        %1805 = vrot.lane.b32.xlu0 %v1793, 125
        %v1806 = vpop.permute.xlu0 %1805
        %1807 = vrot.lane.b32.xlu0 %v1794, 125
        %v1808 = vpop.permute.xlu0 %1807
        %1809 = vrot.lane.b32.xlu0 %v1795, 125
        %v1810 = vpop.permute.xlu0 %1809
        %1811 = vrot.lane.b32.xlu0 %v1796, 125
        %v1812 = vpop.permute.xlu0 %1811
        %1813 = vrot.lane.b32.xlu0 %v1797, 125
        %v1814 = vpop.permute.xlu0 %1813
        %1815 = vrot.lane.b32.xlu0 %v1798, 125
        %v1816 = vpop.permute.xlu0 %1815
        %v1817 = vsel %vm368, %v1806, %v1808
        %v1818 = vsel %vm368, %v1810, %v1812
        %v1819 = vsel %vm368, %v1814, %v1816
        %v1823 = vadd.f32 %v1790, %v1817
        %v1824 = vadd.f32 %v1791, %v1818
        %v1825 = vadd.f32 %v1792, %v1819
        %v1826 = vmul.f32 %v1718, 0.21300554
        %v1827 = vmul.f32 %v1719, 0.21300554
        %v1828 = vmul.f32 %v1720, 0.21300554
        %v1829 = vmul.f32 %v1721, 0.21300554
        %v1830 = vmul.f32 %v1722, 0.21300554
        %v1831 = vmul.f32 %v1723, 0.21300554
        %1838 = vrot.lane.b32.xlu0 %v1826, 124
        %v1839 = vpop.permute.xlu0 %1838
        %1840 = vrot.lane.b32.xlu0 %v1827, 124
        %v1841 = vpop.permute.xlu0 %1840
        %1842 = vrot.lane.b32.xlu0 %v1828, 124
        %v1843 = vpop.permute.xlu0 %1842
        %1844 = vrot.lane.b32.xlu0 %v1829, 124
        %v1845 = vpop.permute.xlu0 %1844
        %1846 = vrot.lane.b32.xlu0 %v1830, 124
        %v1847 = vpop.permute.xlu0 %1846
        %1848 = vrot.lane.b32.xlu0 %v1831, 124
        %v1849 = vpop.permute.xlu0 %1848
        %v1850 = vsel %vm402, %v1839, %v1841
        %v1851 = vsel %vm402, %v1843, %v1845
        %v1852 = vsel %vm402, %v1847, %v1849
        %v1856 = vadd.f32 %v1823, %v1850
        %v1857 = vadd.f32 %v1824, %v1851
        %v1858 = vadd.f32 %v1825, %v1852
        %v1859 = vmul.f32 %v1718, 0.26601171
        %v1860 = vmul.f32 %v1719, 0.26601171
        %v1861 = vmul.f32 %v1720, 0.26601171
        %v1862 = vmul.f32 %v1721, 0.26601171
        %v1863 = vmul.f32 %v1722, 0.26601171
        %v1864 = vmul.f32 %v1723, 0.26601171
        %1871 = vrot.lane.b32.xlu0 %v1859, 123
        %v1872 = vpop.permute.xlu0 %1871
        %1873 = vrot.lane.b32.xlu0 %v1860, 123
        %v1874 = vpop.permute.xlu0 %1873
        %1875 = vrot.lane.b32.xlu0 %v1861, 123
        %v1876 = vpop.permute.xlu0 %1875
        %1877 = vrot.lane.b32.xlu0 %v1862, 123
        %v1878 = vpop.permute.xlu0 %1877
        %1879 = vrot.lane.b32.xlu0 %v1863, 123
        %v1880 = vpop.permute.xlu0 %1879
        %1881 = vrot.lane.b32.xlu0 %v1864, 123
        %v1882 = vpop.permute.xlu0 %1881
        %v1883 = vsel %vm436, %v1872, %v1874
        %v1884 = vsel %vm436, %v1876, %v1878
        %v1885 = vsel %vm436, %v1880, %v1882
        %v1889 = vadd.f32 %v1856, %v1883
        %v1890 = vadd.f32 %v1857, %v1884
        %v1891 = vadd.f32 %v1858, %v1885
        %1892 = vrot.lane.b32.xlu0 %v1826, 122
        %v1893 = vpop.permute.xlu0 %1892
        %1894 = vrot.lane.b32.xlu0 %v1827, 122
        %v1895 = vpop.permute.xlu0 %1894
        %1896 = vrot.lane.b32.xlu0 %v1828, 122
        %v1897 = vpop.permute.xlu0 %1896
        %1898 = vrot.lane.b32.xlu0 %v1829, 122
        %v1899 = vpop.permute.xlu0 %1898
        %1900 = vrot.lane.b32.xlu0 %v1830, 122
        %v1901 = vpop.permute.xlu0 %1900
        %1902 = vrot.lane.b32.xlu0 %v1831, 122
        %v1903 = vpop.permute.xlu0 %1902
        %v1904 = vsel %vm458, %v1893, %v1895
        %v1905 = vsel %vm458, %v1897, %v1899
        %v1906 = vsel %vm458, %v1901, %v1903
        %v1910 = vadd.f32 %v1889, %v1904
        %v1911 = vadd.f32 %v1890, %v1905
        %v1912 = vadd.f32 %v1891, %v1906
        %1913 = vrot.lane.b32.xlu0 %v1793, 121
        %v1914 = vpop.permute.xlu0 %1913
        %1915 = vrot.lane.b32.xlu0 %v1794, 121
        %v1916 = vpop.permute.xlu0 %1915
        %1917 = vrot.lane.b32.xlu0 %v1795, 121
        %v1918 = vpop.permute.xlu0 %1917
        %1919 = vrot.lane.b32.xlu0 %v1796, 121
        %v1920 = vpop.permute.xlu0 %1919
        %1921 = vrot.lane.b32.xlu0 %v1797, 121
        %v1922 = vpop.permute.xlu0 %1921
        %1923 = vrot.lane.b32.xlu0 %v1798, 121
        %v1924 = vpop.permute.xlu0 %1923
        %v1925 = vsel %vm480, %v1914, %v1916
        %v1926 = vsel %vm480, %v1918, %v1920
        %v1927 = vsel %vm480, %v1922, %v1924
        %v1931 = vadd.f32 %v1910, %v1925
        %v1932 = vadd.f32 %v1911, %v1926
        %v1933 = vadd.f32 %v1912, %v1927
        %1934 = vrot.lane.b32.xlu0 %v1760, 120
        %v1935 = vpop.permute.xlu0 %1934
        %1936 = vrot.lane.b32.xlu0 %v1761, 120
        %v1937 = vpop.permute.xlu0 %1936
        %1938 = vrot.lane.b32.xlu0 %v1762, 120
        %v1939 = vpop.permute.xlu0 %1938
        %1940 = vrot.lane.b32.xlu0 %v1763, 120
        %v1941 = vpop.permute.xlu0 %1940
        %1942 = vrot.lane.b32.xlu0 %v1764, 120
        %v1943 = vpop.permute.xlu0 %1942
        %1944 = vrot.lane.b32.xlu0 %v1765, 120
        %v1945 = vpop.permute.xlu0 %1944
        %v1946 = vsel %vm502, %v1935, %v1937
        %v1947 = vsel %vm502, %v1939, %v1941
        %v1948 = vsel %vm502, %v1943, %v1945
        %v1952 = vadd.f32 %v1931, %v1946
        %v1953 = vadd.f32 %v1932, %v1947
        %v1954 = vadd.f32 %v1933, %v1948
        %1955 = vrot.lane.b32.xlu0 %v1727, 119
        %v1956 = vpop.permute.xlu0 %1955
        %1957 = vrot.lane.b32.xlu0 %v1728, 119
        %v1958 = vpop.permute.xlu0 %1957
        %1959 = vrot.lane.b32.xlu0 %v1729, 119
        %v1960 = vpop.permute.xlu0 %1959
        %1961 = vrot.lane.b32.xlu0 %v1730, 119
        %v1962 = vpop.permute.xlu0 %1961
        %1963 = vrot.lane.b32.xlu0 %v1731, 119
        %v1964 = vpop.permute.xlu0 %1963
        %1965 = vrot.lane.b32.xlu0 %v1732, 119
        %v1966 = vpop.permute.xlu0 %1965
        %v1967 = vsel %vm524, %v1956, %v1958
        %v1968 = vsel %vm524, %v1960, %v1962
        %v1969 = vsel %vm524, %v1964, %v1966
        %v1973 = vadd.f32 %v1952, %v1967
        %v1974 = vadd.f32 %v1953, %v1968
        %v1975 = vadd.f32 %v1954, %v1969
        %v1976 = vmul.f32 %v1719, 0.0010283801
        %v1977 = vmul.f32 %v1721, 0.0010283801
        %v1978 = vmul.f32 %v1723, 0.0010283801
        %1985 = vrot.lane.b32.xlu0 %v1724, 118
        %v1986 = vpop.permute.xlu0 %1985
        %1987 = vrot.lane.b32.xlu0 %v1976, 118
        %v1988 = vpop.permute.xlu0 %1987
        %1989 = vrot.lane.b32.xlu0 %v1725, 118
        %v1990 = vpop.permute.xlu0 %1989
        %1991 = vrot.lane.b32.xlu0 %v1977, 118
        %v1992 = vpop.permute.xlu0 %1991
        %1993 = vrot.lane.b32.xlu0 %v1726, 118
        %v1994 = vpop.permute.xlu0 %1993
        %1995 = vrot.lane.b32.xlu0 %v1978, 118
        %v1996 = vpop.permute.xlu0 %1995
        %v1997 = vsel %vm555, %v1986, %v1988
        %v1998 = vsel %vm555, %v1990, %v1992
        %v1999 = vsel %vm555, %v1994, %v1996
        %v2003 = vadd.f32 %v1973, %v1997
        %v2004 = vadd.f32 %v1974, %v1998
        %v2005 = vadd.f32 %v1975, %v1999
        %v2006 = vmul.f32 %v2003, 0.0010283801
        %v2007 = vmul.f32 %v2003, 0.007598758
        %v2008 = vmul.f32 %v2004, 0.007598758
        %v2011 = vrot.slane %v2007, 1
        %v2012 = vrot.slane %v2008, 1
        %v2013 = vsel %vm570, %v2011, %v2012
        %v2015 = vadd.f32 %v2006, %v2013
        %v2016 = vmul.f32 %v2003, 0.036000773
        %v2017 = vmul.f32 %v2004, 0.036000773
        %v2020 = vrot.slane %v2016, 2
        %v2021 = vrot.slane %v2017, 2
        %v2022 = vsel %vm580, %v2020, %v2021
        %v2024 = vadd.f32 %v2015, %v2022
        %v2025 = vmul.f32 %v2003, 0.10936069
        %v2026 = vmul.f32 %v2004, 0.10936069
        %v2029 = vrot.slane %v2025, 3
        %v2030 = vrot.slane %v2026, 3
        %v2031 = vsel %vm590, %v2029, %v2030
        %v2033 = vadd.f32 %v2024, %v2031
        %v2034 = vmul.f32 %v2003, 0.21300554
        %v2035 = vmul.f32 %v2004, 0.21300554
        %v2038 = vrot.slane %v2034, 4
        %v2039 = vrot.slane %v2035, 4
        %v2040 = vsel %vm600, %v2038, %v2039
        %v2042 = vadd.f32 %v2033, %v2040
        %v2043 = vmul.f32 %v2003, 0.26601171
        %v2044 = vmul.f32 %v2004, 0.26601171
        %v2047 = vrot.slane %v2043, 5
        %v2048 = vrot.slane %v2044, 5
        %v2049 = vsel %vm610, %v2047, %v2048
        %v2051 = vadd.f32 %v2042, %v2049
        %v2052 = vrot.slane %v2034, 6
        %v2053 = vrot.slane %v2035, 6
        %v2054 = vsel %vm616, %v2052, %v2053
        %v2056 = vadd.f32 %v2051, %v2054
        %v2057 = vrot.slane %v2025, 7
        %v2058 = vrot.slane %v2026, 7
        %v2059 = vsel %vm622, %v2057, %v2058
        %v2061 = vadd.f32 %v2056, %v2059
        %v2062 = vadd.f32 %v2061, %v2017
        %v2063 = vmul.f32 %v2005, 0.007598758
        %v2065 = vrot.slane %v2063, 1
        %v2066 = vsel %vm570, %v2012, %v2065
        %v2068 = vadd.f32 %v2062, %v2066
        %v2069 = vmul.f32 %v2004, 0.0010283801
        %v2070 = vmul.f32 %v2005, 0.0010283801
        %v2073 = vrot.slane %v2069, 2
        %v2074 = vrot.slane %v2070, 2
        %v2075 = vsel %vm580, %v2073, %v2074
        %v2077 = vadd.f32 %v2068, %v2075
        %v2078 = vmul.f32 %v643, %v643
        %v2079 = vmul.f32 %v997, %v997
        %v2080 = vmul.f32 %v643, %v997
        %v2081 = vsub.f32 %v1357, %v2078
        %v2082 = vsub.f32 %v1717, %v2079
        %v2083 = vsub.f32 %v2077, %v2080
        %v2084 = vmul.f32 %v2083, 2.0
        %v2085 = vstv %s260
        %v2086 = vadd.f32 %v2084, %v2085
        %v2087 = vadd.f32 %v2081, %v2082
        %v2088 = vadd.f32 %v2087, %v2085
        %v2089 = vmul.f32 %v2080, 2.0
        %v2090 = vstv %s259
        %v2091 = vadd.f32 %v2089, %v2090
        %v2092 = vmul.f32 %v2091, %v2086
        %v2093 = vadd.f32 %v2078, %v2079
        %v2094 = vadd.f32 %v2093, %v2090
        %v2095 = vmul.f32 %v2094, %v2088
        %v2096 = vrcp.pop %v2095
        %v2097 = vmul.f32 %v2095, %v2096
        %v2098 = vsub.f32 2.0, %v2097
        %v2099 = vmul.f32 %v2096, %v2098
        %v2100 = vmul.f32 %v2092, %v2099
        %s2101 = smul.u32 %s26, 8
        %s2102 = ssub.s32 6, %s2101
        %v2103 = vlaneseq
        %v2104 = vshrl.u32 %v2103, 7
        %v2105 = vlaneseq
        %v2106 = vand.u32 %v2105, 127
        %v2107 = vstv %s2102
        %vm2108 = vcmp.lt.s32.totalorder %v2104, %v2107
        %vm2109 = vcmp.lt.s32.totalorder %v2106, 6
        %vm2110 = vmand %vm2108, %vm2109
        %v2111 = vsel %vm2110, %v2100, 0.0
        %2112 = vadd.xlane.f32.xlu0 %v2111
        %v2113 = vpop.xlane.xlu0 %2112
        %v2114 = vrot.slane %v2113, 4
        %v2115 = vadd.f32 %v2113, %v2114
        %v2116 = vrot.slane %v2115, 2
        %v2117 = vadd.f32 %v2115, %v2116
        %v2118 = vrot.slane %v2117, 1
        %v2119 = vadd.f32 %v2117, %v2118
        %s2120 = vtos %v2119
        %p2121 = scmp.eq.s32.totalorder %s26, 0
        // Predicated region
        $region45: #{tpu_custom_call.1} parent=31 // pred_check
          %p2122 = pneg %p2121
        $region46: #{tpu_custom_call.1} parent=31 // pred_check_branch
          %2124 = sbr.rel (%p2122) target = $region48
        $region47: #{tpu_custom_call.1} parent=31 // pred_region
          %vm2125 = vcmask 0
          %2126 = vst.msk [vmem:[%s258] sm:$0x1] %vm2125, 0.0
        $region48: #{tpu_custom_call.1} parent=31 // pred_fallthru
          _
        %v2127 = vld [vmem:[%s258] sm:$0x1]
        %v2128 = vstv %s2120
        %v2129 = vadd.f32 %v2127, %v2128
        %vm2130 = vcmask 0
        %2131 = vst.msk [vmem:[%s258] sm:$0x1] %vm2130, %v2129
        %p2132 = scmp.lt.s32.totalorder %s25, 5
        %s2133 = scalar_select %p2132, %s25, 5
        %s2134 = scalar_lea.vmem %s3, %s2133
        // Predicated region
        $region49: #{tpu_custom_call.1} parent=31 // pred_check
          %p2135 = pneg %p128
        $region50: #{tpu_custom_call.1} parent=31 // pred_check_branch
          %2137 = sbr.rel (%p2135) target = $region52
        $region51: #{tpu_custom_call.1} parent=31 // pred_region
          _
        $region52: #{tpu_custom_call.1} parent=31 // pred_fallthru
          _
      $region32: #{tpu_custom_call.1} parent=5 // pred_fallthru
        _
      %p2138 = scmp.le.s32.totalorder 2, %s16
      // Predicated region
      $region53: #{tpu_custom_call.1} parent=5 // pred_check
        %p2139 = pneg %p2138
      $region54: #{tpu_custom_call.1} parent=5 // pred_check_branch
        %2141 = sbr.rel (%p2139) target = $region56
      $region55: #{tpu_custom_call.1} parent=5 // pred_region
        %s2142 = ssub.s32 %s16, 2
        // Predicated region
        $region57: #{tpu_custom_call.1} parent=55 // pred_check
          %p2143 = pneg %p134
        $region58: #{tpu_custom_call.1} parent=55 // pred_check_branch
          %2145 = sbr.rel (%p2143) target = $region60
        $region59: #{tpu_custom_call.1} parent=55 // pred_region
          %p2146 = scmp.lt.s32.totalorder %s27, 5
          %s2147 = scalar_select %p2146, %s27, 5
          %s2148 = scalar_lea.vmem %s3, %s2147
        $region60: #{tpu_custom_call.1} parent=55 // pred_fallthru
          _
      $region56: #{tpu_custom_call.1} parent=5 // pred_fallthru
        _
    $region6: #{tpu_custom_call.1} parent=1 // loop_footer
      %s20 = sadd.s32 1, %s16
    $region7: #{tpu_custom_call.1} parent=1 // loop_footer_branch
      %15 = sbr.rel target = $region3
    $region8: #{tpu_custom_call.1} parent=1 // loop_exit
      _
    %2149 = vsyncpa [#allocation3], 1
    %s2150 = scalar_lea.sflag [#allocation3], 1
    %2151 = vsyncpa %s2150, 1
    %2152 = vsyncpa [#allocation7], 1
    %s2153 = scalar_lea.sflag [#allocation7], 1
    %2154 = vsyncpa %s2153, 1
    %2155 = vsyncpa [#allocation4], 1
    %s2156 = scalar_lea.sflag [#allocation4], 1
    %2157 = vsyncpa %s2156, 1

</llo_original>
